<compile_context>
chip_gen: v5e
topology: v5e:2x2
jax: 0.10.0
libtpu: 0.0.40
codegen_flags: <defaults>
</compile_context>

<pallas_src>
import functools

import jax
import jax.numpy as jnp
from jax import lax
from jax.experimental import pallas as pl
from jax.experimental.pallas import tpu as pltpu

EPS = 1e-5  # PyTorch BatchNorm1d default eps


# --------------------------------------------------------------------------
# In-kernel math helpers
# --------------------------------------------------------------------------
def _softplus(x):
    # PyTorch nn.Softplus (beta=1, threshold=20).
    safe = jnp.minimum(x, 20.0)
    return jnp.where(x > 20.0, x, jnp.log(1.0 + jnp.exp(safe)))


def _sigmoid(x):
    # Overflow-safe logistic.  The shared 1/(1+z) goes through the EUP
    # approximate reciprocal (frees the VALU); one Newton step restores
    # ~f32 accuracy.
    z = jnp.exp(-jnp.abs(x))
    d = 1.0 + z
    r = pl.reciprocal(d, approx=True)
    r = r * (2.0 - d * r)                      # Newton refinement
    return jnp.where(x >= 0.0, r, z * r)


def _fused_gate_input(an_ref, bd_ref, wa_ref, wb_ref):
    """Single large matmul per weight instead of M small per-neighbor dots.

    an_ref: (M, TN, A), bd_ref: (M, TN, B).  Concatenating the M slabs along
    sublanes is a no-op relabeling for TN % 8 == 0, so the MXU sees one
    (M*TN, A) @ (A, 2A) and one (M*TN, B) @ (B, 2A) stream.
    """
    m = an_ref.shape[0]
    an = jnp.concatenate([an_ref[j] for j in range(m)], axis=0)
    bd = jnp.concatenate([bd_ref[j] for j in range(m)], axis=0)
    return (jnp.dot(an, wa_ref[...], preferred_element_type=jnp.float32)
            + jnp.dot(bd, wb_ref[...], preferred_element_type=jnp.float32))


# --------------------------------------------------------------------------
# Kernels
# --------------------------------------------------------------------------
def bn1_stats_kernel(an_ref, bd_ref, selfg_ref, wa_ref, wb_ref, stats_ref):
    """Per-tile bn1 sum / sum-of-squares of the gated pre-activations.

    Padded atoms contribute exact zeros (all padded inputs are zero-padded),
    so no mask is needed; the wrapper divides by the true N*M.
    """
    m = an_ref.shape[0]
    tn, c2 = selfg_ref.shape
    gg = _fused_gate_input(an_ref, bd_ref, wa_ref, wb_ref)   # (M*TN, 2A)
    selfg = selfg_ref[...]                                   # (TN, 2A)

    s = jnp.zeros((1, c2), jnp.float32)
    ss = jnp.zeros((1, c2), jnp.float32)
    for j in range(m):              # M is small & static -> unrolled VPU work
        gj = gg[j * tn:(j + 1) * tn] + selfg
        s = s + jnp.sum(gj, axis=0, keepdims=True)
        ss = ss + jnp.sum(gj * gj, axis=0, keepdims=True)
    stats_ref[...] = jnp.concatenate([s, ss], axis=0)[None]  # (1, 2, 2A)


def gate_pool_kernel(an_ref, bd_ref, selfg_ref, wa_ref, wb_ref, ss1_ref,
                     pooled_ref, bn2p_ref, *, n_valid):
    """Normalize (bn1 scale/shift), gate (sigmoid * softplus), neighbor-sum,
    and emit per-tile bn2 partial statistics of the pooled result."""
    t = pl.program_id(0)
    m = an_ref.shape[0]
    tn, a_len = pooled_ref.shape

    gg = _fused_gate_input(an_ref, bd_ref, wa_ref, wb_ref)   # (M*TN, 2A)
    selfg = selfg_ref[...]                                   # (TN, 2A)
    scale = ss1_ref[0:1, :]                                  # (1, 2A)
    shift = ss1_ref[1:2, :]

    acc = jnp.zeros((tn, a_len), jnp.float32)
    for j in range(m):
        gj = (gg[j * tn:(j + 1) * tn] + selfg) * scale + shift
        filt = _sigmoid(gj[:, :a_len])
        core = _softplus(gj[:, a_len:])
        acc = acc + filt * core                # neighbor sum, no pooling matrix
    pooled_ref[...] = acc

    # bn2 partial stats over the *valid* atoms of this tile only.
    row = lax.broadcasted_iota(jnp.int32, (tn, 1), 0)
    pm = jnp.where(t * tn + row < n_valid, acc, 0.0)
    bn2p_ref[...] = jnp.concatenate(
        [jnp.sum(pm, axis=0, keepdims=True),
         jnp.sum(pm * pm, axis=0, keepdims=True)], axis=0)[None]   # (1, 2, A)


def bn2_residual_kernel(pooled_ref, atom_ref, ss2_ref, out_ref):
    """bn2 affine (precomputed scale/shift) + residual + softplus, per tile."""
    y = pooled_ref[...] * ss2_ref[0:1, :] + ss2_ref[1:2, :]
    out_ref[...] = _softplus(atom_ref[...] + y)


# --------------------------------------------------------------------------
# Wrapper
# --------------------------------------------------------------------------
def _vmem_capacity_bytes(default_bytes=64 << 20):
    try:
        return int(getattr(pltpu.get_tpu_info(), "vmem_capacity_bytes",
                           default_bytes))
    except Exception:  # interpret mode / query unavailable
        return default_bytes


def _pick_atoms_per_tile(n_atoms, n_nbr, a_len, b_len, itemsize, budget_bytes,
                         row_mult):
    """Largest row_mult-aligned atom tile whose resident VMEM (double-buffered
    streamed blocks + in-kernel gated intermediate) fits the budget."""
    per_atom = (2 * (n_nbr * (a_len + b_len) * itemsize      # nbr + bond blocks
                     + 2 * a_len * 4                          # selfg block (f32)
                     + a_len * 4)                             # pooled block
                + n_nbr * 2 * a_len * 4)                      # gated intermediate
    tn = budget_bytes // max(per_atom, 1)
    tn = max(row_mult, (int(tn) // row_mult) * row_mult)
    n_pad_min = ((n_atoms + row_mult - 1) // row_mult) * row_mult
    return min(tn, max(row_mult, n_pad_min))


@functools.partial(jax.jit, static_argnames=("atoms_per_tile", "stream_dtype"))
def conv_layer_forward(atom_in, nbr_fea, nbr_idx, params, *,
                       atoms_per_tile=None, stream_dtype=jnp.float32):
    N, M = nbr_idx.shape
    A = atom_in.shape[1]
    B = nbr_fea.shape[2]

    itemsize = jnp.dtype(stream_dtype).itemsize
    row_mult = 8 if itemsize >= 4 else 16      # sublane packing: f32 / bf16

    vmem_cap = _vmem_capacity_bytes()
    vmem_limit = int(min(vmem_cap // 2, 64 << 20))
    if atoms_per_tile is None:
        atoms_per_tile = _pick_atoms_per_tile(
            N, M, A, B, itemsize, min(vmem_limit // 3, 12 << 20), row_mult)
    TN = max(row_mult, (int(atoms_per_tile) // row_mult) * row_mult)
    n_tiles = int(pl.cdiv(N, TN))
    N_pad = int(n_tiles * TN)

    W, b = params["W"], params["b"]            # (2A+B, 2A), (2A,)
    w_self, w_atom, w_bond = W[:A], W[A:2 * A], W[2 * A:]

    # Self contribution (+ bias): once per atom, never at N*M rows.
    selfg = (atom_in @ w_self + b).astype(jnp.float32)       # (N, 2A)

    # Neighbor-major gather: the gather writes (M, N, A) directly; no
    # (N, M, A+B) concat and no transpose of the big tensor.  Only the small
    # bond tensor is transposed.
    atom_nbr = jnp.take(atom_in, nbr_idx.T, axis=0)          # (M, N, A)
    bond = jnp.swapaxes(nbr_fea, 0, 1)                       # (M, N, B)

    pad = N_pad - N
    if pad:
        atom_nbr = jnp.pad(atom_nbr, ((0, 0), (0, pad), (0, 0)))
        bond = jnp.pad(bond, ((0, 0), (0, pad), (0, 0)))
        selfg = jnp.pad(selfg, ((0, pad), (0, 0)))
        atom_res = jnp.pad(atom_in, ((0, pad), (0, 0)))
    else:
        atom_res = atom_in

    # Dominant (N*M)-row streams (read twice: stats + gate/pool); bf16 halves
    # their HBM traffic, matmuls still accumulate in f32.
    atom_nbr = atom_nbr.astype(stream_dtype)
    bond = bond.astype(stream_dtype)
    wa = w_atom.astype(stream_dtype)
    wb = w_bond.astype(stream_dtype)

    cparams = pltpu.CompilerParams(dimension_semantics=("parallel",),
                                   vmem_limit_bytes=vmem_limit)

    nb_spec = pl.BlockSpec((M, TN, A), lambda t: (0, t, 0))
    bd_spec = pl.BlockSpec((M, TN, B), lambda t: (0, t, 0))
    sg_spec = pl.BlockSpec((TN, 2 * A), lambda t: (t, 0))
    wa_spec = pl.BlockSpec((A, 2 * A), lambda t: (0, 0))
    wb_spec = pl.BlockSpec((B, 2 * A), lambda t: (0, 0))

    # ---- pass 1: global bn1 statistics (per-tile partials, combined in JAX).
    bn1_parts = pl.pallas_call(
        bn1_stats_kernel,
        out_shape=jax.ShapeDtypeStruct((n_tiles, 2, 2 * A), jnp.float32),
        grid_spec=pltpu.PrefetchScalarGridSpec(
            num_scalar_prefetch=0, grid=(n_tiles,),
            in_specs=[nb_spec, bd_spec, sg_spec, wa_spec, wb_spec],
            out_specs=pl.BlockSpec((1, 2, 2 * A), lambda t: (t, 0, 0))),
        compiler_params=cparams,
    )(atom_nbr, bond, selfg, wa, wb)

    rows = float(N * M)
    mean1 = bn1_parts[:, 0, :].sum(axis=0) / rows
    var1 = jnp.maximum(bn1_parts[:, 1, :].sum(axis=0) / rows - mean1 * mean1, 0.0)
    scale1 = params["bn1_g"] * lax.rsqrt(var1 + EPS)
    shift1 = params["bn1_b"] - mean1 * scale1
    ss1 = jnp.stack([scale1, shift1]).astype(jnp.float32)     # (2, 2A)

    # ---- pass 2: normalize + gate + neighbor-sum (+ bn2 partial stats).
    pooled, bn2_parts = pl.pallas_call(
        functools.partial(gate_pool_kernel, n_valid=N),
        out_shape=(jax.ShapeDtypeStruct((N_pad, A), jnp.float32),
                   jax.ShapeDtypeStruct((n_tiles, 2, A), jnp.float32)),
        grid_spec=pltpu.PrefetchScalarGridSpec(
            num_scalar_prefetch=0, grid=(n_tiles,),
            in_specs=[nb_spec, bd_spec, sg_spec, wa_spec, wb_spec,
                      pl.BlockSpec((2, 2 * A), lambda t: (0, 0))],
            out_specs=[pl.BlockSpec((TN, A), lambda t: (t, 0)),
                       pl.BlockSpec((1, 2, A), lambda t: (t, 0, 0))]),
        compiler_params=cparams,
    )(atom_nbr, bond, selfg, wa, wb, ss1)

    mean2 = bn2_parts[:, 0, :].sum(axis=0) / float(N)
    var2 = jnp.maximum(bn2_parts[:, 1, :].sum(axis=0) / float(N) - mean2 * mean2,
                       0.0)
    scale2 = params["bn2_g"] * lax.rsqrt(var2 + EPS)
    shift2 = params["bn2_b"] - mean2 * scale2
    ss2 = jnp.stack([scale2, shift2]).astype(jnp.float32)     # (2, A)

    # ---- pass 3: bn2 affine + residual + softplus, tiled over atoms.
    out = pl.pallas_call(
        bn2_residual_kernel,
        out_shape=jax.ShapeDtypeStruct((N_pad, A), jnp.float32),
        grid_spec=pltpu.PrefetchScalarGridSpec(
            num_scalar_prefetch=0, grid=(n_tiles,),
            in_specs=[pl.BlockSpec((TN, A), lambda t: (t, 0)),
                      pl.BlockSpec((TN, A), lambda t: (t, 0)),
                      pl.BlockSpec((2, A), lambda t: (0, 0))],
            out_specs=pl.BlockSpec((TN, A), lambda t: (t, 0))),
        compiler_params=cparams,
    )(pooled, atom_res, ss2)

    return out[:N]


# --------------------------------------------------------------------------
# Pure-JAX reference (mirror of the PyTorch forward, training-mode BN)
# --------------------------------------------------------------------------
def conv_layer_reference(atom_in, nbr_fea, nbr_idx, params):
    N, M = nbr_idx.shape
    A = atom_in.shape[1]
    W, b = params["W"], params["b"]
    atom_nbr = atom_in[nbr_idx]                                        # (N, M, A)
    total = jnp.concatenate(
        [jnp.broadcast_to(atom_in[:, None, :], (N, M, A)), atom_nbr, nbr_fea],
        axis=2)
    gated = total @ W + b                                              # (N, M, 2A)
    flat = gated.reshape(-1, 2 * A)
    mean = flat.mean(0)
    var = ((flat - mean) ** 2).mean(0)
    flat = (flat - mean) / jnp.sqrt(var + EPS) * params["bn1_g"] + params["bn1_b"]
    gated = flat.reshape(N, M, 2 * A)
    filt = jax.nn.sigmoid(gated[..., :A])
    core = jax.nn.softplus(gated[..., A:])
    summed = (filt * core).sum(1)                                      # (N, A)
    mean2 = summed.mean(0)
    var2 = ((summed - mean2) ** 2).mean(0)
    summed = (summed - mean2) / jnp.sqrt(var2 + EPS) * params["bn2_g"] + params["bn2_b"]
    return jax.nn.softplus(atom_in + summed)


if __name__ == "__main__":
    # N deliberately not a multiple of the tile so the padded / masked tail
    # path is exercised; atoms_per_tile=8 -> 3 tiles of 8 atoms (4 padded).
    N, M, A, B = 20, 4, 32, 16

    key = jax.random.PRNGKey(0)
    k1, k2, k3, k4, k5, k6, k7, k8, k9 = jax.random.split(key, 9)

    atom_in = jax.random.normal(k1, (N, A), jnp.float32)
    nbr_fea = jax.random.normal(k2, (N, M, B), jnp.float32)
    nbr_idx = jax.random.randint(k3, (N, M), 0, N, jnp.int32)

    # fc_full: Linear(2A+B, 2A), stored pre-transposed as (in, out).
    fan_in = 2 * A + B
    bound = float(fan_in) ** -0.5
    params = {
        "W": jax.random.uniform(k4, (fan_in, 2 * A), jnp.float32, -bound, bound),
        "b": jax.random.uniform(k5, (2 * A,), jnp.float32, -bound, bound),
        "bn1_g": 1.0 + 0.1 * jax.random.normal(k6, (2 * A,), jnp.float32),
        "bn1_b": 0.1 * jax.random.normal(k7, (2 * A,), jnp.float32),
        "bn2_g": 1.0 + 0.1 * jax.random.normal(k8, (A,), jnp.float32),
        "bn2_b": 0.1 * jax.random.normal(k9, (A,), jnp.float32),
    }

    out = conv_layer_forward(atom_in, nbr_fea, nbr_idx, params, atoms_per_tile=8)
    out = jax.block_until_ready(out)

    ref = jax.block_until_ready(
        conv_layer_reference(atom_in, nbr_fea, nbr_idx, params))

    assert out.shape == (N, A) and out.dtype == jnp.float32
    # 1e-3 covers the EUP approximate-reciprocal (+ Newton) sigmoid path;
    # everything else stays f32 in this configuration.
    assert jnp.allclose(out, ref, atol=1e-3, rtol=1e-3), (
        f"max abs err {jnp.max(jnp.abs(out - ref))}")
    print("KERNEL_OK")
</pallas_src>

<mosaic_0001>
module attributes {stable_mosaic.version = 11 : i64} {
  func.func @gate_pool_kernel(%arg0: i32, %arg1: memref<4x8x32xf32, #tpu.memory_space<vmem>>, %arg2: memref<4x8x16xf32, #tpu.memory_space<vmem>>, %arg3: memref<8x64xf32, #tpu.memory_space<vmem>>, %arg4: memref<32x64xf32, #tpu.memory_space<vmem>>, %arg5: memref<16x64xf32, #tpu.memory_space<vmem>>, %arg6: memref<2x64xf32, #tpu.memory_space<vmem>>, %arg7: memref<8x32xf32, #tpu.memory_space<vmem>>, %arg8: memref<1x2x32xf32, #tpu.memory_space<vmem>>) attributes {dimension_semantics = [#tpu.dimension_semantics<parallel>], iteration_bounds = array<i64: 3>, scalar_prefetch = 0 : i64, scratch_operands = 0 : i64, tpu.core_type = #tpu.core_type<tc>, window_params = [{transform_indices = @transform_0, window_bounds = array<i64: 4, 8, 32>}, {transform_indices = @transform_1, window_bounds = array<i64: 4, 8, 16>}, {transform_indices = @transform_2, window_bounds = array<i64: 8, 64>}, {pipeline_mode = #tpu.pipeline_mode<synchronous>, transform_indices = @transform_3, window_bounds = array<i64: 32, 64>}, {pipeline_mode = #tpu.pipeline_mode<synchronous>, transform_indices = @transform_4, window_bounds = array<i64: 16, 64>}, {pipeline_mode = #tpu.pipeline_mode<synchronous>, transform_indices = @transform_5, window_bounds = array<i64: 2, 64>}, {transform_indices = @transform_6, window_bounds = array<i64: 8, 32>}, {transform_indices = @transform_7, window_bounds = array<i64: 1, 2, 32>}]} {
    %c0 = arith.constant 0 : index
    %c0_0 = arith.constant 0 : index
    %c0_1 = arith.constant 0 : index
    %0 = vector.load %arg1[%c0, %c0_0, %c0_1] : memref<4x8x32xf32, #tpu.memory_space<vmem>>, vector<1x8x32xf32>
    %1 = vector.shape_cast %0 : vector<1x8x32xf32> to vector<8x32xf32>
    %c1 = arith.constant 1 : index
    %c0_2 = arith.constant 0 : index
    %c0_3 = arith.constant 0 : index
    %2 = vector.load %arg1[%c1, %c0_2, %c0_3] : memref<4x8x32xf32, #tpu.memory_space<vmem>>, vector<1x8x32xf32>
    %3 = vector.shape_cast %2 : vector<1x8x32xf32> to vector<8x32xf32>
    %c2 = arith.constant 2 : index
    %c0_4 = arith.constant 0 : index
    %c0_5 = arith.constant 0 : index
    %4 = vector.load %arg1[%c2, %c0_4, %c0_5] : memref<4x8x32xf32, #tpu.memory_space<vmem>>, vector<1x8x32xf32>
    %5 = vector.shape_cast %4 : vector<1x8x32xf32> to vector<8x32xf32>
    %c3 = arith.constant 3 : index
    %c0_6 = arith.constant 0 : index
    %c0_7 = arith.constant 0 : index
    %6 = vector.load %arg1[%c3, %c0_6, %c0_7] : memref<4x8x32xf32, #tpu.memory_space<vmem>>, vector<1x8x32xf32>
    %7 = vector.shape_cast %6 : vector<1x8x32xf32> to vector<8x32xf32>
    %8 = tpu.concatenate %1, %3, %5, %7 in 0 : vector<8x32xf32>, vector<8x32xf32>, vector<8x32xf32>, vector<8x32xf32> -> vector<32x32xf32>
    %c0_8 = arith.constant 0 : index
    %c0_9 = arith.constant 0 : index
    %c0_10 = arith.constant 0 : index
    %9 = vector.load %arg2[%c0_8, %c0_9, %c0_10] : memref<4x8x16xf32, #tpu.memory_space<vmem>>, vector<1x8x16xf32>
    %10 = vector.shape_cast %9 : vector<1x8x16xf32> to vector<8x16xf32>
    %c1_11 = arith.constant 1 : index
    %c0_12 = arith.constant 0 : index
    %c0_13 = arith.constant 0 : index
    %11 = vector.load %arg2[%c1_11, %c0_12, %c0_13] : memref<4x8x16xf32, #tpu.memory_space<vmem>>, vector<1x8x16xf32>
    %12 = vector.shape_cast %11 : vector<1x8x16xf32> to vector<8x16xf32>
    %c2_14 = arith.constant 2 : index
    %c0_15 = arith.constant 0 : index
    %c0_16 = arith.constant 0 : index
    %13 = vector.load %arg2[%c2_14, %c0_15, %c0_16] : memref<4x8x16xf32, #tpu.memory_space<vmem>>, vector<1x8x16xf32>
    %14 = vector.shape_cast %13 : vector<1x8x16xf32> to vector<8x16xf32>
    %c3_17 = arith.constant 3 : index
    %c0_18 = arith.constant 0 : index
    %c0_19 = arith.constant 0 : index
    %15 = vector.load %arg2[%c3_17, %c0_18, %c0_19] : memref<4x8x16xf32, #tpu.memory_space<vmem>>, vector<1x8x16xf32>
    %16 = vector.shape_cast %15 : vector<1x8x16xf32> to vector<8x16xf32>
    %17 = tpu.concatenate %10, %12, %14, %16 in 0 : vector<8x16xf32>, vector<8x16xf32>, vector<8x16xf32>, vector<8x16xf32> -> vector<32x16xf32>
    %c0_20 = arith.constant 0 : index
    %c0_21 = arith.constant 0 : index
    %18 = vector.load %arg4[%c0_20, %c0_21] : memref<32x64xf32, #tpu.memory_space<vmem>>, vector<32x64xf32>
    %cst = arith.constant dense<0.000000e+00> : vector<32x64xf32>
    %19 = tpu.matmul %8, %18, %cst {dimension_numbers = #tpu.dot_dimension_numbers<[1], [0], [0], [1], [0, 0, 1, 1], [], []>} : vector<32x32xf32>, vector<32x64xf32>, vector<32x64xf32> -> vector<32x64xf32>
    %c0_22 = arith.constant 0 : index
    %c0_23 = arith.constant 0 : index
    %20 = vector.load %arg5[%c0_22, %c0_23] : memref<16x64xf32, #tpu.memory_space<vmem>>, vector<16x64xf32>
    %cst_24 = arith.constant dense<0.000000e+00> : vector<32x64xf32>
    %21 = tpu.matmul %17, %20, %cst_24 {dimension_numbers = #tpu.dot_dimension_numbers<[1], [0], [0], [1], [0, 0, 1, 1], [], []>} : vector<32x16xf32>, vector<16x64xf32>, vector<32x64xf32> -> vector<32x64xf32>
    %22 = arith.addf %19, %21 : vector<32x64xf32>
    %c0_25 = arith.constant 0 : index
    %c0_26 = arith.constant 0 : index
    %23 = vector.load %arg3[%c0_25, %c0_26] : memref<8x64xf32, #tpu.memory_space<vmem>>, vector<8x64xf32>
    %c0_27 = arith.constant 0 : index
    %c0_28 = arith.constant 0 : index
    %24 = vector.load %arg6[%c0_27, %c0_28] : memref<2x64xf32, #tpu.memory_space<vmem>>, vector<1x64xf32>
    %c1_29 = arith.constant 1 : index
    %c0_30 = arith.constant 0 : index
    %25 = vector.load %arg6[%c1_29, %c0_30] : memref<2x64xf32, #tpu.memory_space<vmem>>, vector<1x64xf32>
    %cst_31 = arith.constant 0.000000e+00 : f32
    %26 = vector.broadcast %cst_31 : f32 to vector<8x32xf32>
    %27 = vector.extract_strided_slice %22 {offsets = [0, 0], sizes = [8, 64], strides = [1, 1]} : vector<32x64xf32> to vector<8x64xf32>
    %28 = arith.addf %27, %23 : vector<8x64xf32>
    %29 = vector.broadcast %24 : vector<1x64xf32> to vector<8x64xf32>
    %30 = arith.mulf %28, %29 : vector<8x64xf32>
    %31 = vector.broadcast %25 : vector<1x64xf32> to vector<8x64xf32>
    %32 = arith.addf %30, %31 : vector<8x64xf32>
    %33 = vector.extract_strided_slice %32 {offsets = [0, 0], sizes = [8, 32], strides = [1, 1]} : vector<8x64xf32> to vector<8x32xf32>
    %34 = math.absf %33 : vector<8x32xf32>
    %cst_32 = arith.constant 0.000000e+00 : f32
    %35 = vector.broadcast %cst_32 : f32 to vector<8x32xf32>
    %36 = arith.subf %35, %34 : vector<8x32xf32>
    %37 = math.exp %36 : vector<8x32xf32>
    %cst_33 = arith.constant 1.000000e+00 : f32
    %38 = vector.broadcast %cst_33 : f32 to vector<8x32xf32>
    %39 = arith.addf %38, %37 : vector<8x32xf32>
    %40 = tpu.reciprocal %39 {approx = true} : vector<8x32xf32> -> vector<8x32xf32>
    %41 = arith.mulf %39, %40 : vector<8x32xf32>
    %cst_34 = arith.constant 2.000000e+00 : f32
    %42 = vector.broadcast %cst_34 : f32 to vector<8x32xf32>
    %43 = arith.subf %42, %41 : vector<8x32xf32>
    %44 = arith.mulf %40, %43 : vector<8x32xf32>
    %cst_35 = arith.constant 0.000000e+00 : f32
    %45 = vector.broadcast %cst_35 : f32 to vector<8x32xf32>
    %46 = arith.cmpf oge, %33, %45 : vector<8x32xf32>
    %47 = arith.mulf %37, %44 : vector<8x32xf32>
    %48 = arith.select %46, %44, %47 : vector<8x32xi1>, vector<8x32xf32>
    %49 = vector.extract_strided_slice %32 {offsets = [0, 32], sizes = [8, 32], strides = [1, 1]} : vector<8x64xf32> to vector<8x32xf32>
    %cst_36 = arith.constant 2.000000e+01 : f32
    %50 = vector.broadcast %cst_36 : f32 to vector<8x32xf32>
    %51 = arith.minimumf %49, %50 : vector<8x32xf32>
    %cst_37 = arith.constant 2.000000e+01 : f32
    %52 = vector.broadcast %cst_37 : f32 to vector<8x32xf32>
    %53 = arith.cmpf ogt, %49, %52 : vector<8x32xf32>
    %54 = math.exp %51 : vector<8x32xf32>
    %cst_38 = arith.constant 1.000000e+00 : f32
    %55 = vector.broadcast %cst_38 : f32 to vector<8x32xf32>
    %56 = arith.addf %55, %54 : vector<8x32xf32>
    %57 = math.log %56 : vector<8x32xf32>
    %58 = arith.select %53, %49, %57 : vector<8x32xi1>, vector<8x32xf32>
    %59 = arith.mulf %48, %58 : vector<8x32xf32>
    %60 = arith.addf %26, %59 : vector<8x32xf32>
    %61 = vector.extract_strided_slice %22 {offsets = [8, 0], sizes = [8, 64], strides = [1, 1]} : vector<32x64xf32> to vector<8x64xf32>
    %62 = arith.addf %61, %23 : vector<8x64xf32>
    %63 = vector.broadcast %24 : vector<1x64xf32> to vector<8x64xf32>
    %64 = arith.mulf %62, %63 : vector<8x64xf32>
    %65 = vector.broadcast %25 : vector<1x64xf32> to vector<8x64xf32>
    %66 = arith.addf %64, %65 : vector<8x64xf32>
    %67 = vector.extract_strided_slice %66 {offsets = [0, 0], sizes = [8, 32], strides = [1, 1]} : vector<8x64xf32> to vector<8x32xf32>
    %68 = math.absf %67 : vector<8x32xf32>
    %cst_39 = arith.constant 0.000000e+00 : f32
    %69 = vector.broadcast %cst_39 : f32 to vector<8x32xf32>
    %70 = arith.subf %69, %68 : vector<8x32xf32>
    %71 = math.exp %70 : vector<8x32xf32>
    %cst_40 = arith.constant 1.000000e+00 : f32
    %72 = vector.broadcast %cst_40 : f32 to vector<8x32xf32>
    %73 = arith.addf %72, %71 : vector<8x32xf32>
    %74 = tpu.reciprocal %73 {approx = true} : vector<8x32xf32> -> vector<8x32xf32>
    %75 = arith.mulf %73, %74 : vector<8x32xf32>
    %cst_41 = arith.constant 2.000000e+00 : f32
    %76 = vector.broadcast %cst_41 : f32 to vector<8x32xf32>
    %77 = arith.subf %76, %75 : vector<8x32xf32>
    %78 = arith.mulf %74, %77 : vector<8x32xf32>
    %cst_42 = arith.constant 0.000000e+00 : f32
    %79 = vector.broadcast %cst_42 : f32 to vector<8x32xf32>
    %80 = arith.cmpf oge, %67, %79 : vector<8x32xf32>
    %81 = arith.mulf %71, %78 : vector<8x32xf32>
    %82 = arith.select %80, %78, %81 : vector<8x32xi1>, vector<8x32xf32>
    %83 = vector.extract_strided_slice %66 {offsets = [0, 32], sizes = [8, 32], strides = [1, 1]} : vector<8x64xf32> to vector<8x32xf32>
    %cst_43 = arith.constant 2.000000e+01 : f32
    %84 = vector.broadcast %cst_43 : f32 to vector<8x32xf32>
    %85 = arith.minimumf %83, %84 : vector<8x32xf32>
    %cst_44 = arith.constant 2.000000e+01 : f32
    %86 = vector.broadcast %cst_44 : f32 to vector<8x32xf32>
    %87 = arith.cmpf ogt, %83, %86 : vector<8x32xf32>
    %88 = math.exp %85 : vector<8x32xf32>
    %cst_45 = arith.constant 1.000000e+00 : f32
    %89 = vector.broadcast %cst_45 : f32 to vector<8x32xf32>
    %90 = arith.addf %89, %88 : vector<8x32xf32>
    %91 = math.log %90 : vector<8x32xf32>
    %92 = arith.select %87, %83, %91 : vector<8x32xi1>, vector<8x32xf32>
    %93 = arith.mulf %82, %92 : vector<8x32xf32>
    %94 = arith.addf %60, %93 : vector<8x32xf32>
    %95 = vector.extract_strided_slice %22 {offsets = [16, 0], sizes = [8, 64], strides = [1, 1]} : vector<32x64xf32> to vector<8x64xf32>
    %96 = arith.addf %95, %23 : vector<8x64xf32>
    %97 = vector.broadcast %24 : vector<1x64xf32> to vector<8x64xf32>
    %98 = arith.mulf %96, %97 : vector<8x64xf32>
    %99 = vector.broadcast %25 : vector<1x64xf32> to vector<8x64xf32>
    %100 = arith.addf %98, %99 : vector<8x64xf32>
    %101 = vector.extract_strided_slice %100 {offsets = [0, 0], sizes = [8, 32], strides = [1, 1]} : vector<8x64xf32> to vector<8x32xf32>
    %102 = math.absf %101 : vector<8x32xf32>
    %cst_46 = arith.constant 0.000000e+00 : f32
    %103 = vector.broadcast %cst_46 : f32 to vector<8x32xf32>
    %104 = arith.subf %103, %102 : vector<8x32xf32>
    %105 = math.exp %104 : vector<8x32xf32>
    %cst_47 = arith.constant 1.000000e+00 : f32
    %106 = vector.broadcast %cst_47 : f32 to vector<8x32xf32>
    %107 = arith.addf %106, %105 : vector<8x32xf32>
    %108 = tpu.reciprocal %107 {approx = true} : vector<8x32xf32> -> vector<8x32xf32>
    %109 = arith.mulf %107, %108 : vector<8x32xf32>
    %cst_48 = arith.constant 2.000000e+00 : f32
    %110 = vector.broadcast %cst_48 : f32 to vector<8x32xf32>
    %111 = arith.subf %110, %109 : vector<8x32xf32>
    %112 = arith.mulf %108, %111 : vector<8x32xf32>
    %cst_49 = arith.constant 0.000000e+00 : f32
    %113 = vector.broadcast %cst_49 : f32 to vector<8x32xf32>
    %114 = arith.cmpf oge, %101, %113 : vector<8x32xf32>
    %115 = arith.mulf %105, %112 : vector<8x32xf32>
    %116 = arith.select %114, %112, %115 : vector<8x32xi1>, vector<8x32xf32>
    %117 = vector.extract_strided_slice %100 {offsets = [0, 32], sizes = [8, 32], strides = [1, 1]} : vector<8x64xf32> to vector<8x32xf32>
    %cst_50 = arith.constant 2.000000e+01 : f32
    %118 = vector.broadcast %cst_50 : f32 to vector<8x32xf32>
    %119 = arith.minimumf %117, %118 : vector<8x32xf32>
    %cst_51 = arith.constant 2.000000e+01 : f32
    %120 = vector.broadcast %cst_51 : f32 to vector<8x32xf32>
    %121 = arith.cmpf ogt, %117, %120 : vector<8x32xf32>
    %122 = math.exp %119 : vector<8x32xf32>
    %cst_52 = arith.constant 1.000000e+00 : f32
    %123 = vector.broadcast %cst_52 : f32 to vector<8x32xf32>
    %124 = arith.addf %123, %122 : vector<8x32xf32>
    %125 = math.log %124 : vector<8x32xf32>
    %126 = arith.select %121, %117, %125 : vector<8x32xi1>, vector<8x32xf32>
    %127 = arith.mulf %116, %126 : vector<8x32xf32>
    %128 = arith.addf %94, %127 : vector<8x32xf32>
    %129 = vector.extract_strided_slice %22 {offsets = [24, 0], sizes = [8, 64], strides = [1, 1]} : vector<32x64xf32> to vector<8x64xf32>
    %130 = arith.addf %129, %23 : vector<8x64xf32>
    %131 = vector.broadcast %24 : vector<1x64xf32> to vector<8x64xf32>
    %132 = arith.mulf %130, %131 : vector<8x64xf32>
    %133 = vector.broadcast %25 : vector<1x64xf32> to vector<8x64xf32>
    %134 = arith.addf %132, %133 : vector<8x64xf32>
    %135 = vector.extract_strided_slice %134 {offsets = [0, 0], sizes = [8, 32], strides = [1, 1]} : vector<8x64xf32> to vector<8x32xf32>
    %136 = math.absf %135 : vector<8x32xf32>
    %cst_53 = arith.constant 0.000000e+00 : f32
    %137 = vector.broadcast %cst_53 : f32 to vector<8x32xf32>
    %138 = arith.subf %137, %136 : vector<8x32xf32>
    %139 = math.exp %138 : vector<8x32xf32>
    %cst_54 = arith.constant 1.000000e+00 : f32
    %140 = vector.broadcast %cst_54 : f32 to vector<8x32xf32>
    %141 = arith.addf %140, %139 : vector<8x32xf32>
    %142 = tpu.reciprocal %141 {approx = true} : vector<8x32xf32> -> vector<8x32xf32>
    %143 = arith.mulf %141, %142 : vector<8x32xf32>
    %cst_55 = arith.constant 2.000000e+00 : f32
    %144 = vector.broadcast %cst_55 : f32 to vector<8x32xf32>
    %145 = arith.subf %144, %143 : vector<8x32xf32>
    %146 = arith.mulf %142, %145 : vector<8x32xf32>
    %cst_56 = arith.constant 0.000000e+00 : f32
    %147 = vector.broadcast %cst_56 : f32 to vector<8x32xf32>
    %148 = arith.cmpf oge, %135, %147 : vector<8x32xf32>
    %149 = arith.mulf %139, %146 : vector<8x32xf32>
    %150 = arith.select %148, %146, %149 : vector<8x32xi1>, vector<8x32xf32>
    %151 = vector.extract_strided_slice %134 {offsets = [0, 32], sizes = [8, 32], strides = [1, 1]} : vector<8x64xf32> to vector<8x32xf32>
    %cst_57 = arith.constant 2.000000e+01 : f32
    %152 = vector.broadcast %cst_57 : f32 to vector<8x32xf32>
    %153 = arith.minimumf %151, %152 : vector<8x32xf32>
    %cst_58 = arith.constant 2.000000e+01 : f32
    %154 = vector.broadcast %cst_58 : f32 to vector<8x32xf32>
    %155 = arith.cmpf ogt, %151, %154 : vector<8x32xf32>
    %156 = math.exp %153 : vector<8x32xf32>
    %cst_59 = arith.constant 1.000000e+00 : f32
    %157 = vector.broadcast %cst_59 : f32 to vector<8x32xf32>
    %158 = arith.addf %157, %156 : vector<8x32xf32>
    %159 = math.log %158 : vector<8x32xf32>
    %160 = arith.select %155, %151, %159 : vector<8x32xi1>, vector<8x32xf32>
    %161 = arith.mulf %150, %160 : vector<8x32xf32>
    %162 = arith.addf %128, %161 : vector<8x32xf32>
    %c0_60 = arith.constant 0 : index
    %c0_61 = arith.constant 0 : index
    %163 = vector.load %arg7[%c0_60, %c0_61] : memref<8x32xf32, #tpu.memory_space<vmem>>, vector<8x32xf32>
    tpu.vector_store %arg7[%c0_60, %c0_61], %162 {strides = array<i32>} : memref<8x32xf32, #tpu.memory_space<vmem>>, vector<8x32xf32>,
    %164 = tpu.iota {dimensions = array<i32: 0>} : vector<8x1xi32>
    %c8_i32 = arith.constant 8 : i32
    %165 = arith.muli %arg0, %c8_i32 : i32
    %166 = vector.broadcast %165 : i32 to vector<8x1xi32>
    %167 = arith.addi %166, %164 : vector<8x1xi32>
    %c20_i32 = arith.constant 20 : i32
    %168 = vector.broadcast %c20_i32 : i32 to vector<8x1xi32>
    %169 = arith.cmpi slt, %167, %168 : vector<8x1xi32>
    %cst_62 = arith.constant 0.000000e+00 : f32
    %170 = vector.shape_cast %169 : vector<8x1xi1> to vector<8x1xi1>
    %171 = vector.broadcast %170 : vector<8x1xi1> to vector<8x32xi1>
    %172 = vector.broadcast %cst_62 : f32 to vector<8x32xf32>
    %173 = arith.select %171, %162, %172 : vector<8x32xi1>, vector<8x32xf32>
    %cst_63 = arith.constant dense<0.000000e+00> : vector<32xf32>
    %174 = vector.multi_reduction <add>, %173, %cst_63 [0] : vector<8x32xf32> to vector<32xf32>
    %175 = vector.shape_cast %174 : vector<32xf32> to vector<1x32xf32>
    %176 = arith.mulf %173, %173 : vector<8x32xf32>
    %cst_64 = arith.constant dense<0.000000e+00> : vector<32xf32>
    %177 = vector.multi_reduction <add>, %176, %cst_64 [0] : vector<8x32xf32> to vector<32xf32>
    %178 = vector.shape_cast %177 : vector<32xf32> to vector<1x32xf32>
    %179 = tpu.concatenate %175, %178 in 0 : vector<1x32xf32>, vector<1x32xf32> -> vector<2x32xf32>
    %180 = vector.shape_cast %179 : vector<2x32xf32> to vector<1x2x32xf32>
    %c0_65 = arith.constant 0 : index
    %c0_66 = arith.constant 0 : index
    %c0_67 = arith.constant 0 : index
    %181 = vector.load %arg8[%c0_65, %c0_66, %c0_67] : memref<1x2x32xf32, #tpu.memory_space<vmem>>, vector<1x2x32xf32>
    tpu.vector_store %arg8[%c0_65, %c0_66, %c0_67], %180 {strides = array<i32>} : memref<1x2x32xf32, #tpu.memory_space<vmem>>, vector<1x2x32xf32>,
    return
  }
  func.func @transform_0(%arg0: i32) -> (i32, i32, i32) {
    %c0_i32 = arith.constant 0 : i32
    %c0_i32_0 = arith.constant 0 : i32
    %c0_i32_1 = arith.constant 0 : i32
    return %c0_i32, %arg0, %c0_i32_0 : i32, i32, i32
  }
  func.func @transform_1(%arg0: i32) -> (i32, i32, i32) {
    %c0_i32 = arith.constant 0 : i32
    %c0_i32_0 = arith.constant 0 : i32
    %c0_i32_1 = arith.constant 0 : i32
    return %c0_i32, %arg0, %c0_i32_0 : i32, i32, i32
  }
  func.func @transform_2(%arg0: i32) -> (i32, i32) {
    %c0_i32 = arith.constant 0 : i32
    %c0_i32_0 = arith.constant 0 : i32
    return %arg0, %c0_i32 : i32, i32
  }
  func.func @transform_3(%arg0: i32) -> (i32, i32) {
    %c0_i32 = arith.constant 0 : i32
    %c0_i32_0 = arith.constant 0 : i32
    %c0_i32_1 = arith.constant 0 : i32
    return %c0_i32, %c0_i32_0 : i32, i32
  }
  func.func @transform_4(%arg0: i32) -> (i32, i32) {
    %c0_i32 = arith.constant 0 : i32
    %c0_i32_0 = arith.constant 0 : i32
    %c0_i32_1 = arith.constant 0 : i32
    return %c0_i32, %c0_i32_0 : i32, i32
  }
  func.func @transform_5(%arg0: i32) -> (i32, i32) {
    %c0_i32 = arith.constant 0 : i32
    %c0_i32_0 = arith.constant 0 : i32
    %c0_i32_1 = arith.constant 0 : i32
    return %c0_i32, %c0_i32_0 : i32, i32
  }
  func.func @transform_6(%arg0: i32) -> (i32, i32) {
    %c0_i32 = arith.constant 0 : i32
    %c0_i32_0 = arith.constant 0 : i32
    return %arg0, %c0_i32 : i32, i32
  }
  func.func @transform_7(%arg0: i32) -> (i32, i32, i32) {
    %c0_i32 = arith.constant 0 : i32
    %c0_i32_0 = arith.constant 0 : i32
    %c0_i32_1 = arith.constant 0 : i32
    return %arg0, %c0_i32, %c0_i32_0 : i32, i32, i32
  }
}

module attributes {stable_mosaic.version = 11 : i64} {
  func.func @bn1_stats_kernel(%arg0: i32, %arg1: memref<4x8x32xf32, #tpu.memory_space<vmem>>, %arg2: memref<4x8x16xf32, #tpu.memory_space<vmem>>, %arg3: memref<8x64xf32, #tpu.memory_space<vmem>>, %arg4: memref<32x64xf32, #tpu.memory_space<vmem>>, %arg5: memref<16x64xf32, #tpu.memory_space<vmem>>, %arg6: memref<1x2x64xf32, #tpu.memory_space<vmem>>) attributes {dimension_semantics = [#tpu.dimension_semantics<parallel>], iteration_bounds = array<i64: 3>, scalar_prefetch = 0 : i64, scratch_operands = 0 : i64, tpu.core_type = #tpu.core_type<tc>, window_params = [{transform_indices = @transform_0, window_bounds = array<i64: 4, 8, 32>}, {transform_indices = @transform_1, window_bounds = array<i64: 4, 8, 16>}, {transform_indices = @transform_2, window_bounds = array<i64: 8, 64>}, {pipeline_mode = #tpu.pipeline_mode<synchronous>, transform_indices = @transform_3, window_bounds = array<i64: 32, 64>}, {pipeline_mode = #tpu.pipeline_mode<synchronous>, transform_indices = @transform_4, window_bounds = array<i64: 16, 64>}, {transform_indices = @transform_5, window_bounds = array<i64: 1, 2, 64>}]} {
    %c0 = arith.constant 0 : index
    %c0_0 = arith.constant 0 : index
    %c0_1 = arith.constant 0 : index
    %0 = vector.load %arg1[%c0, %c0_0, %c0_1] : memref<4x8x32xf32, #tpu.memory_space<vmem>>, vector<1x8x32xf32>
    %1 = vector.shape_cast %0 : vector<1x8x32xf32> to vector<8x32xf32>
    %c1 = arith.constant 1 : index
    %c0_2 = arith.constant 0 : index
    %c0_3 = arith.constant 0 : index
    %2 = vector.load %arg1[%c1, %c0_2, %c0_3] : memref<4x8x32xf32, #tpu.memory_space<vmem>>, vector<1x8x32xf32>
    %3 = vector.shape_cast %2 : vector<1x8x32xf32> to vector<8x32xf32>
    %c2 = arith.constant 2 : index
    %c0_4 = arith.constant 0 : index
    %c0_5 = arith.constant 0 : index
    %4 = vector.load %arg1[%c2, %c0_4, %c0_5] : memref<4x8x32xf32, #tpu.memory_space<vmem>>, vector<1x8x32xf32>
    %5 = vector.shape_cast %4 : vector<1x8x32xf32> to vector<8x32xf32>
    %c3 = arith.constant 3 : index
    %c0_6 = arith.constant 0 : index
    %c0_7 = arith.constant 0 : index
    %6 = vector.load %arg1[%c3, %c0_6, %c0_7] : memref<4x8x32xf32, #tpu.memory_space<vmem>>, vector<1x8x32xf32>
    %7 = vector.shape_cast %6 : vector<1x8x32xf32> to vector<8x32xf32>
    %8 = tpu.concatenate %1, %3, %5, %7 in 0 : vector<8x32xf32>, vector<8x32xf32>, vector<8x32xf32>, vector<8x32xf32> -> vector<32x32xf32>
    %c0_8 = arith.constant 0 : index
    %c0_9 = arith.constant 0 : index
    %c0_10 = arith.constant 0 : index
    %9 = vector.load %arg2[%c0_8, %c0_9, %c0_10] : memref<4x8x16xf32, #tpu.memory_space<vmem>>, vector<1x8x16xf32>
    %10 = vector.shape_cast %9 : vector<1x8x16xf32> to vector<8x16xf32>
    %c1_11 = arith.constant 1 : index
    %c0_12 = arith.constant 0 : index
    %c0_13 = arith.constant 0 : index
    %11 = vector.load %arg2[%c1_11, %c0_12, %c0_13] : memref<4x8x16xf32, #tpu.memory_space<vmem>>, vector<1x8x16xf32>
    %12 = vector.shape_cast %11 : vector<1x8x16xf32> to vector<8x16xf32>
    %c2_14 = arith.constant 2 : index
    %c0_15 = arith.constant 0 : index
    %c0_16 = arith.constant 0 : index
    %13 = vector.load %arg2[%c2_14, %c0_15, %c0_16] : memref<4x8x16xf32, #tpu.memory_space<vmem>>, vector<1x8x16xf32>
    %14 = vector.shape_cast %13 : vector<1x8x16xf32> to vector<8x16xf32>
    %c3_17 = arith.constant 3 : index
    %c0_18 = arith.constant 0 : index
    %c0_19 = arith.constant 0 : index
    %15 = vector.load %arg2[%c3_17, %c0_18, %c0_19] : memref<4x8x16xf32, #tpu.memory_space<vmem>>, vector<1x8x16xf32>
    %16 = vector.shape_cast %15 : vector<1x8x16xf32> to vector<8x16xf32>
    %17 = tpu.concatenate %10, %12, %14, %16 in 0 : vector<8x16xf32>, vector<8x16xf32>, vector<8x16xf32>, vector<8x16xf32> -> vector<32x16xf32>
    %c0_20 = arith.constant 0 : index
    %c0_21 = arith.constant 0 : index
    %18 = vector.load %arg4[%c0_20, %c0_21] : memref<32x64xf32, #tpu.memory_space<vmem>>, vector<32x64xf32>
    %cst = arith.constant dense<0.000000e+00> : vector<32x64xf32>
    %19 = tpu.matmul %8, %18, %cst {dimension_numbers = #tpu.dot_dimension_numbers<[1], [0], [0], [1], [0, 0, 1, 1], [], []>} : vector<32x32xf32>, vector<32x64xf32>, vector<32x64xf32> -> vector<32x64xf32>
    %c0_22 = arith.constant 0 : index
    %c0_23 = arith.constant 0 : index
    %20 = vector.load %arg5[%c0_22, %c0_23] : memref<16x64xf32, #tpu.memory_space<vmem>>, vector<16x64xf32>
    %cst_24 = arith.constant dense<0.000000e+00> : vector<32x64xf32>
    %21 = tpu.matmul %17, %20, %cst_24 {dimension_numbers = #tpu.dot_dimension_numbers<[1], [0], [0], [1], [0, 0, 1, 1], [], []>} : vector<32x16xf32>, vector<16x64xf32>, vector<32x64xf32> -> vector<32x64xf32>
    %22 = arith.addf %19, %21 : vector<32x64xf32>
    %c0_25 = arith.constant 0 : index
    %c0_26 = arith.constant 0 : index
    %23 = vector.load %arg3[%c0_25, %c0_26] : memref<8x64xf32, #tpu.memory_space<vmem>>, vector<8x64xf32>
    %cst_27 = arith.constant 0.000000e+00 : f32
    %24 = vector.broadcast %cst_27 : f32 to vector<1x64xf32>
    %cst_28 = arith.constant 0.000000e+00 : f32
    %25 = vector.broadcast %cst_28 : f32 to vector<1x64xf32>
    %26 = vector.extract_strided_slice %22 {offsets = [0, 0], sizes = [8, 64], strides = [1, 1]} : vector<32x64xf32> to vector<8x64xf32>
    %27 = arith.addf %26, %23 : vector<8x64xf32>
    %cst_29 = arith.constant dense<0.000000e+00> : vector<64xf32>
    %28 = vector.multi_reduction <add>, %27, %cst_29 [0] : vector<8x64xf32> to vector<64xf32>
    %29 = vector.shape_cast %28 : vector<64xf32> to vector<1x64xf32>
    %30 = arith.addf %24, %29 : vector<1x64xf32>
    %31 = arith.mulf %27, %27 : vector<8x64xf32>
    %cst_30 = arith.constant dense<0.000000e+00> : vector<64xf32>
    %32 = vector.multi_reduction <add>, %31, %cst_30 [0] : vector<8x64xf32> to vector<64xf32>
    %33 = vector.shape_cast %32 : vector<64xf32> to vector<1x64xf32>
    %34 = arith.addf %25, %33 : vector<1x64xf32>
    %35 = vector.extract_strided_slice %22 {offsets = [8, 0], sizes = [8, 64], strides = [1, 1]} : vector<32x64xf32> to vector<8x64xf32>
    %36 = arith.addf %35, %23 : vector<8x64xf32>
    %cst_31 = arith.constant dense<0.000000e+00> : vector<64xf32>
    %37 = vector.multi_reduction <add>, %36, %cst_31 [0] : vector<8x64xf32> to vector<64xf32>
    %38 = vector.shape_cast %37 : vector<64xf32> to vector<1x64xf32>
    %39 = arith.addf %30, %38 : vector<1x64xf32>
    %40 = arith.mulf %36, %36 : vector<8x64xf32>
    %cst_32 = arith.constant dense<0.000000e+00> : vector<64xf32>
    %41 = vector.multi_reduction <add>, %40, %cst_32 [0] : vector<8x64xf32> to vector<64xf32>
    %42 = vector.shape_cast %41 : vector<64xf32> to vector<1x64xf32>
    %43 = arith.addf %34, %42 : vector<1x64xf32>
    %44 = vector.extract_strided_slice %22 {offsets = [16, 0], sizes = [8, 64], strides = [1, 1]} : vector<32x64xf32> to vector<8x64xf32>
    %45 = arith.addf %44, %23 : vector<8x64xf32>
    %cst_33 = arith.constant dense<0.000000e+00> : vector<64xf32>
    %46 = vector.multi_reduction <add>, %45, %cst_33 [0] : vector<8x64xf32> to vector<64xf32>
    %47 = vector.shape_cast %46 : vector<64xf32> to vector<1x64xf32>
    %48 = arith.addf %39, %47 : vector<1x64xf32>
    %49 = arith.mulf %45, %45 : vector<8x64xf32>
    %cst_34 = arith.constant dense<0.000000e+00> : vector<64xf32>
    %50 = vector.multi_reduction <add>, %49, %cst_34 [0] : vector<8x64xf32> to vector<64xf32>
    %51 = vector.shape_cast %50 : vector<64xf32> to vector<1x64xf32>
    %52 = arith.addf %43, %51 : vector<1x64xf32>
    %53 = vector.extract_strided_slice %22 {offsets = [24, 0], sizes = [8, 64], strides = [1, 1]} : vector<32x64xf32> to vector<8x64xf32>
    %54 = arith.addf %53, %23 : vector<8x64xf32>
    %cst_35 = arith.constant dense<0.000000e+00> : vector<64xf32>
    %55 = vector.multi_reduction <add>, %54, %cst_35 [0] : vector<8x64xf32> to vector<64xf32>
    %56 = vector.shape_cast %55 : vector<64xf32> to vector<1x64xf32>
    %57 = arith.addf %48, %56 : vector<1x64xf32>
    %58 = arith.mulf %54, %54 : vector<8x64xf32>
    %cst_36 = arith.constant dense<0.000000e+00> : vector<64xf32>
    %59 = vector.multi_reduction <add>, %58, %cst_36 [0] : vector<8x64xf32> to vector<64xf32>
    %60 = vector.shape_cast %59 : vector<64xf32> to vector<1x64xf32>
    %61 = arith.addf %52, %60 : vector<1x64xf32>
    %62 = tpu.concatenate %57, %61 in 0 : vector<1x64xf32>, vector<1x64xf32> -> vector<2x64xf32>
    %63 = vector.shape_cast %62 : vector<2x64xf32> to vector<1x2x64xf32>
    %c0_37 = arith.constant 0 : index
    %c0_38 = arith.constant 0 : index
    %c0_39 = arith.constant 0 : index
    %64 = vector.load %arg6[%c0_37, %c0_38, %c0_39] : memref<1x2x64xf32, #tpu.memory_space<vmem>>, vector<1x2x64xf32>
    tpu.vector_store %arg6[%c0_37, %c0_38, %c0_39], %63 {strides = array<i32>} : memref<1x2x64xf32, #tpu.memory_space<vmem>>, vector<1x2x64xf32>,
    return
  }
  func.func @transform_0(%arg0: i32) -> (i32, i32, i32) {
    %c0_i32 = arith.constant 0 : i32
    %c0_i32_0 = arith.constant 0 : i32
    %c0_i32_1 = arith.constant 0 : i32
    return %c0_i32, %arg0, %c0_i32_0 : i32, i32, i32
  }
  func.func @transform_1(%arg0: i32) -> (i32, i32, i32) {
    %c0_i32 = arith.constant 0 : i32
    %c0_i32_0 = arith.constant 0 : i32
    %c0_i32_1 = arith.constant 0 : i32
    return %c0_i32, %arg0, %c0_i32_0 : i32, i32, i32
  }
  func.func @transform_2(%arg0: i32) -> (i32, i32) {
    %c0_i32 = arith.constant 0 : i32
    %c0_i32_0 = arith.constant 0 : i32
    return %arg0, %c0_i32 : i32, i32
  }
  func.func @transform_3(%arg0: i32) -> (i32, i32) {
    %c0_i32 = arith.constant 0 : i32
    %c0_i32_0 = arith.constant 0 : i32
    %c0_i32_1 = arith.constant 0 : i32
    return %c0_i32, %c0_i32_0 : i32, i32
  }
  func.func @transform_4(%arg0: i32) -> (i32, i32) {
    %c0_i32 = arith.constant 0 : i32
    %c0_i32_0 = arith.constant 0 : i32
    %c0_i32_1 = arith.constant 0 : i32
    return %c0_i32, %c0_i32_0 : i32, i32
  }
  func.func @transform_5(%arg0: i32) -> (i32, i32, i32) {
    %c0_i32 = arith.constant 0 : i32
    %c0_i32_0 = arith.constant 0 : i32
    %c0_i32_1 = arith.constant 0 : i32
    return %arg0, %c0_i32, %c0_i32_0 : i32, i32, i32
  }
}

module attributes {stable_mosaic.version = 11 : i64} {
  func.func @bn2_residual_kernel(%arg0: i32, %arg1: memref<8x32xf32, #tpu.memory_space<vmem>>, %arg2: memref<8x32xf32, #tpu.memory_space<vmem>>, %arg3: memref<2x32xf32, #tpu.memory_space<vmem>>, %arg4: memref<8x32xf32, #tpu.memory_space<vmem>>) attributes {dimension_semantics = [#tpu.dimension_semantics<parallel>], iteration_bounds = array<i64: 3>, scalar_prefetch = 0 : i64, scratch_operands = 0 : i64, tpu.core_type = #tpu.core_type<tc>, window_params = [{transform_indices = @transform_0, window_bounds = array<i64: 8, 32>}, {transform_indices = @transform_1, window_bounds = array<i64: 8, 32>}, {pipeline_mode = #tpu.pipeline_mode<synchronous>, transform_indices = @transform_2, window_bounds = array<i64: 2, 32>}, {transform_indices = @transform_3, window_bounds = array<i64: 8, 32>}]} {
    %c0 = arith.constant 0 : index
    %c0_0 = arith.constant 0 : index
    %0 = vector.load %arg1[%c0, %c0_0] : memref<8x32xf32, #tpu.memory_space<vmem>>, vector<8x32xf32>
    %c0_1 = arith.constant 0 : index
    %c0_2 = arith.constant 0 : index
    %1 = vector.load %arg3[%c0_1, %c0_2] : memref<2x32xf32, #tpu.memory_space<vmem>>, vector<1x32xf32>
    %2 = vector.broadcast %1 : vector<1x32xf32> to vector<8x32xf32>
    %3 = arith.mulf %0, %2 : vector<8x32xf32>
    %c1 = arith.constant 1 : index
    %c0_3 = arith.constant 0 : index
    %4 = vector.load %arg3[%c1, %c0_3] : memref<2x32xf32, #tpu.memory_space<vmem>>, vector<1x32xf32>
    %5 = vector.broadcast %4 : vector<1x32xf32> to vector<8x32xf32>
    %6 = arith.addf %3, %5 : vector<8x32xf32>
    %c0_4 = arith.constant 0 : index
    %c0_5 = arith.constant 0 : index
    %7 = vector.load %arg2[%c0_4, %c0_5] : memref<8x32xf32, #tpu.memory_space<vmem>>, vector<8x32xf32>
    %8 = arith.addf %7, %6 : vector<8x32xf32>
    %cst = arith.constant 2.000000e+01 : f32
    %9 = vector.broadcast %cst : f32 to vector<8x32xf32>
    %10 = arith.minimumf %8, %9 : vector<8x32xf32>
    %cst_6 = arith.constant 2.000000e+01 : f32
    %11 = vector.broadcast %cst_6 : f32 to vector<8x32xf32>
    %12 = arith.cmpf ogt, %8, %11 : vector<8x32xf32>
    %13 = math.exp %10 : vector<8x32xf32>
    %cst_7 = arith.constant 1.000000e+00 : f32
    %14 = vector.broadcast %cst_7 : f32 to vector<8x32xf32>
    %15 = arith.addf %14, %13 : vector<8x32xf32>
    %16 = math.log %15 : vector<8x32xf32>
    %17 = arith.select %12, %8, %16 : vector<8x32xi1>, vector<8x32xf32>
    %c0_8 = arith.constant 0 : index
    %c0_9 = arith.constant 0 : index
    %18 = vector.load %arg4[%c0_8, %c0_9] : memref<8x32xf32, #tpu.memory_space<vmem>>, vector<8x32xf32>
    tpu.vector_store %arg4[%c0_8, %c0_9], %17 {strides = array<i32>} : memref<8x32xf32, #tpu.memory_space<vmem>>, vector<8x32xf32>,
    return
  }
  func.func @transform_0(%arg0: i32) -> (i32, i32) {
    %c0_i32 = arith.constant 0 : i32
    %c0_i32_0 = arith.constant 0 : i32
    return %arg0, %c0_i32 : i32, i32
  }
  func.func @transform_1(%arg0: i32) -> (i32, i32) {
    %c0_i32 = arith.constant 0 : i32
    %c0_i32_0 = arith.constant 0 : i32
    return %arg0, %c0_i32 : i32, i32
  }
  func.func @transform_2(%arg0: i32) -> (i32, i32) {
    %c0_i32 = arith.constant 0 : i32
    %c0_i32_0 = arith.constant 0 : i32
    %c0_i32_1 = arith.constant 0 : i32
    return %c0_i32, %c0_i32_0 : i32, i32
  }
  func.func @transform_3(%arg0: i32) -> (i32, i32) {
    %c0_i32 = arith.constant 0 : i32
    %c0_i32_0 = arith.constant 0 : i32
    return %arg0, %c0_i32 : i32, i32
  }
}

</mosaic_0001>

<llo_original>
// kernel: conv_layer_forward.5
$region0: #{conv_layer_forward.5}
  #allocation0 [shape = 'u32[]', space=smem, size = 0x4, offset = 0x4, fixed_abs, tag = 'smem constant byte address 0x4 - core index']
  #allocation1 [shape = 'u32[72,128]{1,0:T(1,128)}', space=vmem, size = 0x9000, scoped, tag = 'internal scratch']
  %s0 = inlined_call_operand.vmem [shape: f32[24,32], index: 0, kind: input, shape index: {}]
  %s1 = inlined_call_operand.vmem [shape: f32[24,32], index: 1, kind: input, shape index: {}]
  %s2 = inlined_call_operand.vmem [shape: f32[2,32], index: 2, kind: input, shape index: {}]
  %s3 = inlined_call_operand.hbm [shape: f32[24,32], index: 3, kind: output, shape index: {}]
  %s4 = sld [smem:[#allocation0]]
  $region45: #{conv_layer_forward.5} parent=0
    _
  %s6 = ssub.s32 1, %s4
  %s7 = scalar_select 0, %s6, %s4
  $region1: #{conv_layer_forward.5} parent=0
    #allocation2 [shape = 'u8[8192]{0}', space=vmem, size = 0x2000, scoped, tag = 'output window, operand 0']
    #allocation3 [shape = 's32[2]{0}', space=sflag, size = 0x8, scoped, tag = 'scoped memory for conv_layer_forward.5']
    %8 = vsyncpa [#allocation3], 0
    %s9 = scalar_lea.sflag [#allocation3], 1
    %10 = vsyncpa %s9, 0
    loop: start=0, step=1, limit=5
    $region2: #{conv_layer_forward.5} parent=1 // loop_pre_header
      _
    $region3: #{conv_layer_forward.5} parent=1 // loop_header
      %s12 = sphi 0, %s16
      %p13 = scmp.ge.s32.totalorder %s12, 5
      %s22 = sphi 0, %s24
      %s25 = sphi 0, %s22
      %s26 = sphi 0, %s25
      %s42 = sphi 0, %s26
      %s48 = sphi 0, %s50
      %s51 = sphi 0, %s48
      %s52 = sphi 0, %s51
      %s68 = sphi 0, %s52
      %s72 = sphi 0, %s72
      %s74 = sphi 0, %s72
      %s75 = sphi 0, %s74
      %s89 = sphi 0, %s75
      %s95 = sphi 0, %s97
      %s98 = sphi 0, %s95
      %s99 = sphi 0, %s98
      %s115 = sphi 0, %s99
    $region4: #{conv_layer_forward.5} parent=1 // loop_header_branch
      %15 = sbr.rel (%p13) target = $region8
    $region5: #{conv_layer_forward.5} parent=1 // loop_body
      %s17 = ssub.s32 %s12, 1
      %s18 = ssub.s32 %s12, 2
      %s19 = sadd.s32 %s12, 1
      %s20 = ssub.s32 %s12, %s19
      %p21 = scmp.eq.s32.totalorder %s20, 0
      %s23 = sadd.s32 %s22, 1
      %s24 = scalar_select %p21, %s22, %s23
      %p27 = pneg %p21
      %p28 = scmp.eq.s32.totalorder %s12, 2
      %p29 = por %p27, %p28
      %p30 = scmp.ne.s32.totalorder %s22, %s25
      %p31 = scmp.eq.s32.totalorder %s12, 0
      %p32 = por %p30, %p31
      %p33 = scmp.ne.s32.totalorder %s22, %s25
      %p34 = scmp.eq.s32.totalorder %s17, 2
      %p35 = por %p33, %p34
      %p36 = scmp.ne.s32.totalorder %s25, %s26
      %p37 = scmp.eq.s32.totalorder %s17, 0
      %p38 = por %p36, %p37
      %p39 = scmp.ne.s32.totalorder %s25, %s26
      %p40 = scmp.eq.s32.totalorder %s18, 2
      %p41 = por %p39, %p40
      %p43 = scmp.ne.s32.totalorder %s26, %s42
      %p44 = scmp.eq.s32.totalorder %s18, 0
      %p45 = por %p43, %p44
      %s46 = ssub.s32 %s12, %s19
      %p47 = scmp.eq.s32.totalorder %s46, 0
      %s49 = sadd.s32 %s48, 1
      %s50 = scalar_select %p47, %s48, %s49
      %p53 = pneg %p47
      %p54 = scmp.eq.s32.totalorder %s12, 2
      %p55 = por %p53, %p54
      %p56 = scmp.ne.s32.totalorder %s48, %s51
      %p57 = scmp.eq.s32.totalorder %s12, 0
      %p58 = por %p56, %p57
      %p59 = scmp.ne.s32.totalorder %s48, %s51
      %p60 = scmp.eq.s32.totalorder %s17, 2
      %p61 = por %p59, %p60
      %p62 = scmp.ne.s32.totalorder %s51, %s52
      %p63 = scmp.eq.s32.totalorder %s17, 0
      %p64 = por %p62, %p63
      %p65 = scmp.ne.s32.totalorder %s51, %s52
      %p66 = scmp.eq.s32.totalorder %s18, 2
      %p67 = por %p65, %p66
      %p69 = scmp.ne.s32.totalorder %s52, %s68
      %p70 = scmp.eq.s32.totalorder %s18, 0
      %p71 = por %p69, %p70
      %s73 = sadd.s32 %s72, 1
      %p76 = scmp.eq.s32.totalorder %s12, 2
      %p77 = scmp.ne.s32.totalorder %s72, %s74
      %p78 = scmp.eq.s32.totalorder %s12, 0
      %p79 = por %p77, %p78
      %p80 = scmp.ne.s32.totalorder %s72, %s74
      %p81 = scmp.eq.s32.totalorder %s17, 2
      %p82 = por %p80, %p81
      %p83 = scmp.ne.s32.totalorder %s74, %s75
      %p84 = scmp.eq.s32.totalorder %s17, 0
      %p85 = por %p83, %p84
      %p86 = scmp.ne.s32.totalorder %s74, %s75
      %p87 = scmp.eq.s32.totalorder %s18, 2
      %p88 = por %p86, %p87
      %p90 = scmp.ne.s32.totalorder %s75, %s89
      %p91 = scmp.eq.s32.totalorder %s18, 0
      %p92 = por %p90, %p91
      %s93 = ssub.s32 %s12, %s19
      %p94 = scmp.eq.s32.totalorder %s93, 0
      %s96 = sadd.s32 %s95, 1
      %s97 = scalar_select %p94, %s95, %s96
      %p100 = pneg %p94
      %p101 = scmp.eq.s32.totalorder %s12, 2
      %p102 = por %p100, %p101
      %p103 = scmp.ne.s32.totalorder %s95, %s98
      %p104 = scmp.eq.s32.totalorder %s12, 0
      %p105 = por %p103, %p104
      %p106 = scmp.ne.s32.totalorder %s95, %s98
      %p107 = scmp.eq.s32.totalorder %s17, 2
      %p108 = por %p106, %p107
      %p109 = scmp.ne.s32.totalorder %s98, %s99
      %p110 = scmp.eq.s32.totalorder %s17, 0
      %p111 = por %p109, %p110
      %p112 = scmp.ne.s32.totalorder %s98, %s99
      %p113 = scmp.eq.s32.totalorder %s18, 2
      %p114 = por %p112, %p113
      %p116 = scmp.ne.s32.totalorder %s99, %s115
      %p117 = scmp.eq.s32.totalorder %s18, 0
      %p118 = por %p116, %p117
      %p119 = scmp.le.s32.totalorder 1, %s12
      %p120 = scmp.lt.s32.totalorder %s12, 4
      %p121 = pnand %p119, %p120
      %p122 = pneg %p121
      // Predicated region
      $region9: #{conv_layer_forward.5} parent=5 // pred_check
        _
      $region10: #{conv_layer_forward.5} parent=5 // pred_check_branch
        %124 = sbr.rel (%p121) target = $region12
      $region11: #{conv_layer_forward.5} parent=5 // pred_region
        %s125 = ssub.s32 %s12, 1
        // Predicated region
        $region13: #{conv_layer_forward.5} parent=11 // pred_check
          %p126 = pneg %p85
        $region14: #{conv_layer_forward.5} parent=11 // pred_check_branch
          %128 = sbr.rel (%p126) target = $region16
        $region15: #{conv_layer_forward.5} parent=11 // pred_region
          _
        $region16: #{conv_layer_forward.5} parent=11 // pred_fallthru
          _
      $region12: #{conv_layer_forward.5} parent=5 // pred_fallthru
        _
      %p129 = scmp.lt.s32.totalorder %s12, 3
      // Predicated region
      $region17: #{conv_layer_forward.5} parent=5 // pred_check
        %p130 = pneg %p129
      $region18: #{conv_layer_forward.5} parent=5 // pred_check_branch
        %132 = sbr.rel (%p130) target = $region20
      $region19: #{conv_layer_forward.5} parent=5 // pred_region
        // Predicated region
        $region21: #{conv_layer_forward.5} parent=19 // pred_check
          %p133 = pneg %p32
        $region22: #{conv_layer_forward.5} parent=19 // pred_check_branch
          %135 = sbr.rel (%p133) target = $region24
        $region23: #{conv_layer_forward.5} parent=19 // pred_region
          %p136 = scmp.lt.s32.totalorder %s12, 2
          %s137 = scalar_select %p136, %s12, 2
          %s138 = smul.addr %s137, 8
          %s139 = scalar_lea.vmem %s0, %s138
        $region24: #{conv_layer_forward.5} parent=19 // pred_fallthru
          _
        // Predicated region
        $region25: #{conv_layer_forward.5} parent=19 // pred_check
          %p140 = pneg %p58
        $region26: #{conv_layer_forward.5} parent=19 // pred_check_branch
          %142 = sbr.rel (%p140) target = $region28
        $region27: #{conv_layer_forward.5} parent=19 // pred_region
          %p143 = scmp.lt.s32.totalorder %s12, 2
          %s144 = scalar_select %p143, %s12, 2
          %s145 = smul.addr %s144, 8
          %s146 = scalar_lea.vmem %s1, %s145
        $region28: #{conv_layer_forward.5} parent=19 // pred_fallthru
          _
      $region20: #{conv_layer_forward.5} parent=5 // pred_fallthru
        _
      %p147 = scmp.le.s32.totalorder 1, %s12
      %p148 = scmp.lt.s32.totalorder %s12, 4
      %p149 = pnand %p147, %p148
      %p150 = pneg %p149
      // Predicated region
      $region29: #{conv_layer_forward.5} parent=5 // pred_check
        _
      $region30: #{conv_layer_forward.5} parent=5 // pred_check_branch
        %152 = sbr.rel (%p149) target = $region32
      $region31: #{conv_layer_forward.5} parent=5 // pred_region
        %s153 = ssub.s32 %s12, 1
        %p154 = scmp.lt.s32.totalorder %s17, 2
        %s155 = scalar_select %p154, %s17, 2
        %s156 = smul.addr %s155, 8
        %s157 = scalar_lea.vmem %s0, %s156
        %p158 = pneg %p38
        %p159 = pneg %p35
        %p160 = scmp.lt.s32.totalorder %s17, 2
        %s161 = scalar_select %p160, %s17, 2
        %s162 = smul.addr %s161, 8
        %s163 = scalar_lea.vmem %s1, %s162
        %p164 = pneg %p64
        %p165 = pneg %p61
        %p166 = pneg %p85
        %p167 = pneg %p82
        %p168 = pneg %p111
        %p169 = pneg %p108
        %s170 = sand.u32 %s98, 1
        %s171 = scalar_lea.sflag [#allocation3], %s170
        %s172 = sand.u32 %s98, 1
        %s173 = smul.addr %s172, 8
        %s174 = scalar_lea.vmem [#allocation2], %s173
        %p175 = scmp.lt.s32.totalorder %s17, 2
        %s176 = scalar_select %p175, %s17, 2
        %s177 = smul.addr %s176, 8
        %s178 = scalar_lea.vmem %s0, %s177
        %p179 = scmp.lt.s32.totalorder %s17, 2
        %s180 = scalar_select %p179, %s17, 2
        %s181 = smul.addr %s180, 8
        %s182 = scalar_lea.vmem %s1, %s181
        %v183 = vld [vmem:[%s178] sm:$0xff]
        %v184 = vld [vmem:[%s2] sm:$0x1]
        %v185 = vperm.slane %v184, 0
        %v186 = vmul.f32 %v183, %v185
        %v187 = vld [vmem:[%s2 + $0x1] sm:$0x1]
        %v188 = vperm.slane %v187, 0
        %v189 = vadd.f32 %v186, %v188
        %v190 = vld [vmem:[%s182] sm:$0xff]
        %v191 = vadd.f32 %v190, %v189
        %v192 = vmin.f32 %v191, 20.0
        %vm193 = vcmp.gt.f32.partialorder %v191, 20.0
        %v194 = vmul.f32 %v192, 1.442695
        %v195 = vpow.pop %v194
        %v196 = vadd.f32 %v195, 1.0
        %v197 = vlog2.pop %v196
        %v198 = vmul.f32 %v197, 0.6931472
        %v199 = vsel %vm193, %v191, %v198
        %vm200 = vcmask 261120
        %201 = vst.msk [vmem:[%s174] sm:$0xff] %vm200, %v199
        %s202 = sand.u32 %s98, 1
        %s203 = scalar_lea.sflag [#allocation3], %s202
        %s204 = sand.u32 %s98, 1
        %s205 = smul.addr %s204, 8
        %s206 = scalar_lea.vmem [#allocation2], %s205
        // Predicated region
        $region33: #{conv_layer_forward.5} parent=31 // pred_check
          %p207 = pneg %p108
        $region34: #{conv_layer_forward.5} parent=31 // pred_check_branch
          %209 = sbr.rel (%p207) target = $region36
        $region35: #{conv_layer_forward.5} parent=31 // pred_region
          %211 = vsyncadd %s203, 0
          %s212 = smul.addr %s17, 8
          %s213 = scalar_lea.hbm %s3, %s212
          %s215 = sshll.u32 %s206, 4
          %s216 = int_to_ptr.vmem [resolvable:$true] %s215
          %s217 = sshll.u32 %s213, 4
          %s218 = int_to_ptr.hbm [resolvable:$true] %s217
          %220 = dma.vmem_to_hbm [thread:$0]  %s216, 128, %s218, %s203
        $region36: #{conv_layer_forward.5} parent=31 // pred_fallthru
          _
      $region32: #{conv_layer_forward.5} parent=5 // pred_fallthru
        _
      %p221 = scmp.le.s32.totalorder 2, %s12
      // Predicated region
      $region37: #{conv_layer_forward.5} parent=5 // pred_check
        %p222 = pneg %p221
      $region38: #{conv_layer_forward.5} parent=5 // pred_check_branch
        %224 = sbr.rel (%p222) target = $region40
      $region39: #{conv_layer_forward.5} parent=5 // pred_region
        %s225 = ssub.s32 %s12, 2
        // Predicated region
        $region41: #{conv_layer_forward.5} parent=39 // pred_check
          %p226 = pneg %p114
        $region42: #{conv_layer_forward.5} parent=39 // pred_check_branch
          %228 = sbr.rel (%p226) target = $region44
        $region43: #{conv_layer_forward.5} parent=39 // pred_region
          %s229 = sand.u32 %s99, 1
          %s230 = scalar_lea.sflag [#allocation3], %s229
          %s231 = sand.u32 %s99, 1
          %s232 = smul.addr %s231, 8
          %s233 = scalar_lea.vmem [#allocation2], %s232
          %235 = dma.done %s230, 128
        $region44: #{conv_layer_forward.5} parent=39 // pred_fallthru
          _
      $region40: #{conv_layer_forward.5} parent=5 // pred_fallthru
        _
    $region6: #{conv_layer_forward.5} parent=1 // loop_footer
      %s16 = sadd.s32 1, %s12
    $region7: #{conv_layer_forward.5} parent=1 // loop_footer_branch
      %11 = sbr.rel target = $region3
    $region8: #{conv_layer_forward.5} parent=1 // loop_exit
      _
    %236 = vsyncpa [#allocation3], 1
    %s237 = scalar_lea.sflag [#allocation3], 1
    %238 = vsyncpa %s237, 1

// kernel: conv_layer_forward.3
$region0: #{conv_layer_forward.3}
  #allocation0 [shape = 'u32[]', space=smem, size = 0x4, offset = 0x4, fixed_abs, tag = 'smem constant byte address 0x4 - core index']
  #allocation1 [shape = 'u32[72,128]{1,0:T(1,128)}', space=vmem, size = 0x9000, scoped, tag = 'internal scratch']
  %s0 = inlined_call_operand.vmem [shape: f32[4,24,32], index: 0, kind: input, shape index: {}]
  %s1 = inlined_call_operand.vmem [shape: f32[4,24,16], index: 1, kind: input, shape index: {}]
  %s2 = inlined_call_operand.vmem [shape: f32[24,64], index: 2, kind: input, shape index: {}]
  %s3 = inlined_call_operand.vmem [shape: f32[32,64], index: 3, kind: input, shape index: {}]
  %s4 = inlined_call_operand.vmem [shape: f32[16,64], index: 4, kind: input, shape index: {}]
  %s5 = inlined_call_operand.vmem [shape: f32[3,2,64], index: 5, kind: output, shape index: {}]
  %s6 = sld [smem:[#allocation0]]
  $region129: #{conv_layer_forward.3} parent=0
    _
  %s8 = ssub.s32 1, %s6
  %s9 = scalar_select 0, %s8, %s6
  $region1: #{conv_layer_forward.3} parent=0
    #allocation2 [shape = 'u8[32768]{0}', space=vmem, size = 0x8000, scoped, tag = 'input window, operand 0']
    #allocation3 [shape = 'u8[32768]{0}', space=vmem, size = 0x8000, scoped, tag = 'input window, operand 1']
    loop: start=0, step=1, limit=5
    $region2: #{conv_layer_forward.3} parent=1 // loop_pre_header
      _
    $region3: #{conv_layer_forward.3} parent=1 // loop_header
      %s11 = sphi 0, %s15
      %p12 = scmp.ge.s32.totalorder %s11, 5
      %s21 = sphi 0, %s23
      %s24 = sphi 0, %s21
      %s25 = sphi 0, %s24
      %s41 = sphi 0, %s25
      %s47 = sphi 0, %s49
      %s50 = sphi 0, %s47
      %s51 = sphi 0, %s50
      %s67 = sphi 0, %s51
      %s73 = sphi 0, %s75
      %s76 = sphi 0, %s73
      %s77 = sphi 0, %s76
      %s93 = sphi 0, %s77
      %s97 = sphi 0, %s97
      %s99 = sphi 0, %s97
      %s100 = sphi 0, %s99
      %s114 = sphi 0, %s100
      %s118 = sphi 0, %s118
      %s120 = sphi 0, %s118
      %s121 = sphi 0, %s120
      %s135 = sphi 0, %s121
      %s141 = sphi 0, %s143
      %s144 = sphi 0, %s141
      %s145 = sphi 0, %s144
      %s161 = sphi 0, %s145
    $region4: #{conv_layer_forward.3} parent=1 // loop_header_branch
      %14 = sbr.rel (%p12) target = $region8
    $region5: #{conv_layer_forward.3} parent=1 // loop_body
      %s16 = ssub.s32 %s11, 1
      %s17 = ssub.s32 %s11, 2
      %s18 = sadd.s32 %s11, 1
      %s19 = ssub.s32 %s11, %s18
      %p20 = scmp.eq.s32.totalorder %s19, 0
      %s22 = sadd.s32 %s21, 1
      %s23 = scalar_select %p20, %s21, %s22
      %p26 = pneg %p20
      %p27 = scmp.eq.s32.totalorder %s11, 2
      %p28 = por %p26, %p27
      %p29 = scmp.ne.s32.totalorder %s21, %s24
      %p30 = scmp.eq.s32.totalorder %s11, 0
      %p31 = por %p29, %p30
      %p32 = scmp.ne.s32.totalorder %s21, %s24
      %p33 = scmp.eq.s32.totalorder %s16, 2
      %p34 = por %p32, %p33
      %p35 = scmp.ne.s32.totalorder %s24, %s25
      %p36 = scmp.eq.s32.totalorder %s16, 0
      %p37 = por %p35, %p36
      %p38 = scmp.ne.s32.totalorder %s24, %s25
      %p39 = scmp.eq.s32.totalorder %s17, 2
      %p40 = por %p38, %p39
      %p42 = scmp.ne.s32.totalorder %s25, %s41
      %p43 = scmp.eq.s32.totalorder %s17, 0
      %p44 = por %p42, %p43
      %s45 = ssub.s32 %s11, %s18
      %p46 = scmp.eq.s32.totalorder %s45, 0
      %s48 = sadd.s32 %s47, 1
      %s49 = scalar_select %p46, %s47, %s48
      %p52 = pneg %p46
      %p53 = scmp.eq.s32.totalorder %s11, 2
      %p54 = por %p52, %p53
      %p55 = scmp.ne.s32.totalorder %s47, %s50
      %p56 = scmp.eq.s32.totalorder %s11, 0
      %p57 = por %p55, %p56
      %p58 = scmp.ne.s32.totalorder %s47, %s50
      %p59 = scmp.eq.s32.totalorder %s16, 2
      %p60 = por %p58, %p59
      %p61 = scmp.ne.s32.totalorder %s50, %s51
      %p62 = scmp.eq.s32.totalorder %s16, 0
      %p63 = por %p61, %p62
      %p64 = scmp.ne.s32.totalorder %s50, %s51
      %p65 = scmp.eq.s32.totalorder %s17, 2
      %p66 = por %p64, %p65
      %p68 = scmp.ne.s32.totalorder %s51, %s67
      %p69 = scmp.eq.s32.totalorder %s17, 0
      %p70 = por %p68, %p69
      %s71 = ssub.s32 %s11, %s18
      %p72 = scmp.eq.s32.totalorder %s71, 0
      %s74 = sadd.s32 %s73, 1
      %s75 = scalar_select %p72, %s73, %s74
      %p78 = pneg %p72
      %p79 = scmp.eq.s32.totalorder %s11, 2
      %p80 = por %p78, %p79
      %p81 = scmp.ne.s32.totalorder %s73, %s76
      %p82 = scmp.eq.s32.totalorder %s11, 0
      %p83 = por %p81, %p82
      %p84 = scmp.ne.s32.totalorder %s73, %s76
      %p85 = scmp.eq.s32.totalorder %s16, 2
      %p86 = por %p84, %p85
      %p87 = scmp.ne.s32.totalorder %s76, %s77
      %p88 = scmp.eq.s32.totalorder %s16, 0
      %p89 = por %p87, %p88
      %p90 = scmp.ne.s32.totalorder %s76, %s77
      %p91 = scmp.eq.s32.totalorder %s17, 2
      %p92 = por %p90, %p91
      %p94 = scmp.ne.s32.totalorder %s77, %s93
      %p95 = scmp.eq.s32.totalorder %s17, 0
      %p96 = por %p94, %p95
      %s98 = sadd.s32 %s97, 1
      %p101 = scmp.eq.s32.totalorder %s11, 2
      %p102 = scmp.ne.s32.totalorder %s97, %s99
      %p103 = scmp.eq.s32.totalorder %s11, 0
      %p104 = por %p102, %p103
      %p105 = scmp.ne.s32.totalorder %s97, %s99
      %p106 = scmp.eq.s32.totalorder %s16, 2
      %p107 = por %p105, %p106
      %p108 = scmp.ne.s32.totalorder %s99, %s100
      %p109 = scmp.eq.s32.totalorder %s16, 0
      %p110 = por %p108, %p109
      %p111 = scmp.ne.s32.totalorder %s99, %s100
      %p112 = scmp.eq.s32.totalorder %s17, 2
      %p113 = por %p111, %p112
      %p115 = scmp.ne.s32.totalorder %s100, %s114
      %p116 = scmp.eq.s32.totalorder %s17, 0
      %p117 = por %p115, %p116
      %s119 = sadd.s32 %s118, 1
      %p122 = scmp.eq.s32.totalorder %s11, 2
      %p123 = scmp.ne.s32.totalorder %s118, %s120
      %p124 = scmp.eq.s32.totalorder %s11, 0
      %p125 = por %p123, %p124
      %p126 = scmp.ne.s32.totalorder %s118, %s120
      %p127 = scmp.eq.s32.totalorder %s16, 2
      %p128 = por %p126, %p127
      %p129 = scmp.ne.s32.totalorder %s120, %s121
      %p130 = scmp.eq.s32.totalorder %s16, 0
      %p131 = por %p129, %p130
      %p132 = scmp.ne.s32.totalorder %s120, %s121
      %p133 = scmp.eq.s32.totalorder %s17, 2
      %p134 = por %p132, %p133
      %p136 = scmp.ne.s32.totalorder %s121, %s135
      %p137 = scmp.eq.s32.totalorder %s17, 0
      %p138 = por %p136, %p137
      %s139 = ssub.s32 %s11, %s18
      %p140 = scmp.eq.s32.totalorder %s139, 0
      %s142 = sadd.s32 %s141, 1
      %s143 = scalar_select %p140, %s141, %s142
      %p146 = pneg %p140
      %p147 = scmp.eq.s32.totalorder %s11, 2
      %p148 = por %p146, %p147
      %p149 = scmp.ne.s32.totalorder %s141, %s144
      %p150 = scmp.eq.s32.totalorder %s11, 0
      %p151 = por %p149, %p150
      %p152 = scmp.ne.s32.totalorder %s141, %s144
      %p153 = scmp.eq.s32.totalorder %s16, 2
      %p154 = por %p152, %p153
      %p155 = scmp.ne.s32.totalorder %s144, %s145
      %p156 = scmp.eq.s32.totalorder %s16, 0
      %p157 = por %p155, %p156
      %p158 = scmp.ne.s32.totalorder %s144, %s145
      %p159 = scmp.eq.s32.totalorder %s17, 2
      %p160 = por %p158, %p159
      %p162 = scmp.ne.s32.totalorder %s145, %s161
      %p163 = scmp.eq.s32.totalorder %s17, 0
      %p164 = por %p162, %p163
      %p165 = scmp.le.s32.totalorder 1, %s11
      %p166 = scmp.lt.s32.totalorder %s11, 4
      %p167 = pnand %p165, %p166
      %p168 = pneg %p167
      // Predicated region
      $region9: #{conv_layer_forward.3} parent=5 // pred_check
        _
      $region10: #{conv_layer_forward.3} parent=5 // pred_check_branch
        %170 = sbr.rel (%p167) target = $region12
      $region11: #{conv_layer_forward.3} parent=5 // pred_region
        %s171 = ssub.s32 %s11, 1
        // Predicated region
        $region13: #{conv_layer_forward.3} parent=11 // pred_check
          %p172 = pneg %p110
        $region14: #{conv_layer_forward.3} parent=11 // pred_check_branch
          %174 = sbr.rel (%p172) target = $region16
        $region15: #{conv_layer_forward.3} parent=11 // pred_region
          _
        $region16: #{conv_layer_forward.3} parent=11 // pred_fallthru
          _
        // Predicated region
        $region17: #{conv_layer_forward.3} parent=11 // pred_check
          %p175 = pneg %p131
        $region18: #{conv_layer_forward.3} parent=11 // pred_check_branch
          %177 = sbr.rel (%p175) target = $region20
        $region19: #{conv_layer_forward.3} parent=11 // pred_region
          _
        $region20: #{conv_layer_forward.3} parent=11 // pred_fallthru
          _
      $region12: #{conv_layer_forward.3} parent=5 // pred_fallthru
        _
      %p178 = scmp.lt.s32.totalorder %s11, 3
      // Predicated region
      $region21: #{conv_layer_forward.3} parent=5 // pred_check
        %p179 = pneg %p178
      $region22: #{conv_layer_forward.3} parent=5 // pred_check_branch
        %181 = sbr.rel (%p179) target = $region24
      $region23: #{conv_layer_forward.3} parent=5 // pred_region
        // Predicated region
        $region25: #{conv_layer_forward.3} parent=23 // pred_check
          %p182 = pneg %p31
        $region26: #{conv_layer_forward.3} parent=23 // pred_check_branch
          %184 = sbr.rel (%p182) target = $region28
        $region27: #{conv_layer_forward.3} parent=23 // pred_region
          %s185 = sand.u32 %s21, 1
          %s186 = sand.u32 %s21, 1
          %s187 = smul.addr %s186, 32
          %s188 = scalar_lea.vmem [#allocation2], %s187
          %s189 = smul.addr %s11, 8
          %s190 = scalar_lea.vmem %s0, %s189
          // Predicated region
          $region29: #{conv_layer_forward.3} parent=27 // pred_check
            _
          $region30: #{conv_layer_forward.3} parent=27 // pred_check_branch
            %192 = sbr.rel (0) target = $region32
          $region31: #{conv_layer_forward.3} parent=27 // pred_region
            // Predicated region
            $region33: #{conv_layer_forward.3} parent=31 // pred_check
              _
            $region34: #{conv_layer_forward.3} parent=31 // pred_check_branch
              %194 = sbr.rel (0) target = $region36
            $region35: #{conv_layer_forward.3} parent=31 // pred_region
              // Predicated region
              $region48: #{conv_layer_forward.3} parent=35 // pred_check
                _
              $region49: #{conv_layer_forward.3} parent=35 // pred_check_branch
                %216 = sbr.rel (0) target = $region51
              $region50: #{conv_layer_forward.3} parent=35 // pred_region
                loop: start=0, step=1, limit=1
                $region52: #{conv_layer_forward.3} parent=50 // loop_pre_header
                  _
                $region53: #{conv_layer_forward.3} parent=50 // loop_header
                  %s218 = sphi 0, %s222
                  %p219 = scmp.ge.s32.totalorder %s218, 1
                  %s223 = sphi %s190, %s190
                  %s224 = sphi %s188, %s188
                $region54: #{conv_layer_forward.3} parent=50 // loop_header_branch
                  %221 = sbr.rel (%p219) target = $region58
                $region55: #{conv_layer_forward.3} parent=50 // loop_body
                  %v225 = vld [vmem:[%s223] sm:$0xff]
                  %226 = vst [vmem:[%s224] sm:$0xff] %v225
                  %v227 = vld [vmem:[%s223 + $0x18] sm:$0xff]
                  %228 = vst [vmem:[%s224 + $0x8] sm:$0xff] %v227
                  %v229 = vld [vmem:[%s223 + $0x30] sm:$0xff]
                  %230 = vst [vmem:[%s224 + $0x10] sm:$0xff] %v229
                  %v231 = vld [vmem:[%s223 + $0x48] sm:$0xff]
                  %232 = vst [vmem:[%s224 + $0x18] sm:$0xff] %v231
                $region56: #{conv_layer_forward.3} parent=50 // loop_footer
                  %s222 = sadd.s32 1, %s218
                $region57: #{conv_layer_forward.3} parent=50 // loop_footer_branch
                  %217 = sbr.rel target = $region53
                $region58: #{conv_layer_forward.3} parent=50 // loop_exit
                  _
              $region51: #{conv_layer_forward.3} parent=35 // pred_fallthru
                _
              // Predicated region
              $region59: #{conv_layer_forward.3} parent=35 // pred_check
                _
              $region60: #{conv_layer_forward.3} parent=35 // pred_check_branch
                %234 = sbr.rel target = $region62
              $region61: #{conv_layer_forward.3} parent=35 // pred_region
                _
              $region62: #{conv_layer_forward.3} parent=35 // pred_fallthru
                _
            $region36: #{conv_layer_forward.3} parent=31 // pred_fallthru
              _
            // Predicated region
            $region37: #{conv_layer_forward.3} parent=31 // pred_check
              _
            $region38: #{conv_layer_forward.3} parent=31 // pred_check_branch
              %196 = sbr.rel target = $region40
            $region39: #{conv_layer_forward.3} parent=31 // pred_region
              %s198 = ssub.s32 256, 1
              loop: start=0, step=1, limit=1
              $region41: #{conv_layer_forward.3} parent=39 // loop_pre_header
                _
              $region42: #{conv_layer_forward.3} parent=39 // loop_header
                %s200 = sphi 0, %s204
                %p201 = scmp.ge.s32.totalorder %s200, 1
                %s205 = sphi %s190, %s190
                %s206 = sphi %s188, %s188
              $region43: #{conv_layer_forward.3} parent=39 // loop_header_branch
                %203 = sbr.rel (%p201) target = $region47
              $region44: #{conv_layer_forward.3} parent=39 // loop_body
                %v207 = vld [vmem:[%s205] sm:%s198]
                %208 = vst [vmem:[%s206] sm:%s198] %v207
                %v209 = vld [vmem:[%s205 + $0x18] sm:%s198]
                %210 = vst [vmem:[%s206 + $0x8] sm:%s198] %v209
                %v211 = vld [vmem:[%s205 + $0x30] sm:%s198]
                %212 = vst [vmem:[%s206 + $0x10] sm:%s198] %v211
                %v213 = vld [vmem:[%s205 + $0x48] sm:%s198]
                %214 = vst [vmem:[%s206 + $0x18] sm:%s198] %v213
              $region45: #{conv_layer_forward.3} parent=39 // loop_footer
                %s204 = sadd.s32 1, %s200
              $region46: #{conv_layer_forward.3} parent=39 // loop_footer_branch
                %199 = sbr.rel target = $region42
              $region47: #{conv_layer_forward.3} parent=39 // loop_exit
                _
            $region40: #{conv_layer_forward.3} parent=31 // pred_fallthru
              _
          $region32: #{conv_layer_forward.3} parent=27 // pred_fallthru
            _
          %235 = vnop
        $region28: #{conv_layer_forward.3} parent=23 // pred_fallthru
          _
        // Predicated region
        $region63: #{conv_layer_forward.3} parent=23 // pred_check
          %p236 = pneg %p57
        $region64: #{conv_layer_forward.3} parent=23 // pred_check_branch
          %238 = sbr.rel (%p236) target = $region66
        $region65: #{conv_layer_forward.3} parent=23 // pred_region
          %s239 = sand.u32 %s47, 1
          %s240 = sand.u32 %s47, 1
          %s241 = smul.addr %s240, 32
          %s242 = scalar_lea.vmem [#allocation3], %s241
          %s243 = smul.addr %s11, 8
          %s244 = scalar_lea.vmem %s1, %s243
          // Predicated region
          $region67: #{conv_layer_forward.3} parent=65 // pred_check
            _
          $region68: #{conv_layer_forward.3} parent=65 // pred_check_branch
            %246 = sbr.rel (0) target = $region70
          $region69: #{conv_layer_forward.3} parent=65 // pred_region
            // Predicated region
            $region71: #{conv_layer_forward.3} parent=69 // pred_check
              _
            $region72: #{conv_layer_forward.3} parent=69 // pred_check_branch
              %248 = sbr.rel (0) target = $region74
            $region73: #{conv_layer_forward.3} parent=69 // pred_region
              // Predicated region
              $region86: #{conv_layer_forward.3} parent=73 // pred_check
                _
              $region87: #{conv_layer_forward.3} parent=73 // pred_check_branch
                %270 = sbr.rel (0) target = $region89
              $region88: #{conv_layer_forward.3} parent=73 // pred_region
                loop: start=0, step=1, limit=1
                $region90: #{conv_layer_forward.3} parent=88 // loop_pre_header
                  _
                $region91: #{conv_layer_forward.3} parent=88 // loop_header
                  %s272 = sphi 0, %s276
                  %p273 = scmp.ge.s32.totalorder %s272, 1
                  %s277 = sphi %s244, %s244
                  %s278 = sphi %s242, %s242
                $region92: #{conv_layer_forward.3} parent=88 // loop_header_branch
                  %275 = sbr.rel (%p273) target = $region96
                $region93: #{conv_layer_forward.3} parent=88 // loop_body
                  %v279 = vld [vmem:[%s277] sm:$0xff]
                  %280 = vst [vmem:[%s278] sm:$0xff] %v279
                  %v281 = vld [vmem:[%s277 + $0x18] sm:$0xff]
                  %282 = vst [vmem:[%s278 + $0x8] sm:$0xff] %v281
                  %v283 = vld [vmem:[%s277 + $0x30] sm:$0xff]
                  %284 = vst [vmem:[%s278 + $0x10] sm:$0xff] %v283
                  %v285 = vld [vmem:[%s277 + $0x48] sm:$0xff]
                  %286 = vst [vmem:[%s278 + $0x18] sm:$0xff] %v285
                $region94: #{conv_layer_forward.3} parent=88 // loop_footer
                  %s276 = sadd.s32 1, %s272
                $region95: #{conv_layer_forward.3} parent=88 // loop_footer_branch
                  %271 = sbr.rel target = $region91
                $region96: #{conv_layer_forward.3} parent=88 // loop_exit
                  _
              $region89: #{conv_layer_forward.3} parent=73 // pred_fallthru
                _
              // Predicated region
              $region97: #{conv_layer_forward.3} parent=73 // pred_check
                _
              $region98: #{conv_layer_forward.3} parent=73 // pred_check_branch
                %288 = sbr.rel target = $region100
              $region99: #{conv_layer_forward.3} parent=73 // pred_region
                _
              $region100: #{conv_layer_forward.3} parent=73 // pred_fallthru
                _
            $region74: #{conv_layer_forward.3} parent=69 // pred_fallthru
              _
            // Predicated region
            $region75: #{conv_layer_forward.3} parent=69 // pred_check
              _
            $region76: #{conv_layer_forward.3} parent=69 // pred_check_branch
              %250 = sbr.rel target = $region78
            $region77: #{conv_layer_forward.3} parent=69 // pred_region
              %s252 = ssub.s32 256, 1
              loop: start=0, step=1, limit=1
              $region79: #{conv_layer_forward.3} parent=77 // loop_pre_header
                _
              $region80: #{conv_layer_forward.3} parent=77 // loop_header
                %s254 = sphi 0, %s258
                %p255 = scmp.ge.s32.totalorder %s254, 1
                %s259 = sphi %s244, %s244
                %s260 = sphi %s242, %s242
              $region81: #{conv_layer_forward.3} parent=77 // loop_header_branch
                %257 = sbr.rel (%p255) target = $region85
              $region82: #{conv_layer_forward.3} parent=77 // loop_body
                %v261 = vld [vmem:[%s259] sm:%s252]
                %262 = vst [vmem:[%s260] sm:%s252] %v261
                %v263 = vld [vmem:[%s259 + $0x18] sm:%s252]
                %264 = vst [vmem:[%s260 + $0x8] sm:%s252] %v263
                %v265 = vld [vmem:[%s259 + $0x30] sm:%s252]
                %266 = vst [vmem:[%s260 + $0x10] sm:%s252] %v265
                %v267 = vld [vmem:[%s259 + $0x48] sm:%s252]
                %268 = vst [vmem:[%s260 + $0x18] sm:%s252] %v267
              $region83: #{conv_layer_forward.3} parent=77 // loop_footer
                %s258 = sadd.s32 1, %s254
              $region84: #{conv_layer_forward.3} parent=77 // loop_footer_branch
                %253 = sbr.rel target = $region80
              $region85: #{conv_layer_forward.3} parent=77 // loop_exit
                _
            $region78: #{conv_layer_forward.3} parent=69 // pred_fallthru
              _
          $region70: #{conv_layer_forward.3} parent=65 // pred_fallthru
            _
          %289 = vnop
        $region66: #{conv_layer_forward.3} parent=23 // pred_fallthru
          _
        // Predicated region
        $region101: #{conv_layer_forward.3} parent=23 // pred_check
          %p290 = pneg %p83
        $region102: #{conv_layer_forward.3} parent=23 // pred_check_branch
          %292 = sbr.rel (%p290) target = $region104
        $region103: #{conv_layer_forward.3} parent=23 // pred_region
          %p293 = scmp.lt.s32.totalorder %s11, 2
          %s294 = scalar_select %p293, %s11, 2
          %s295 = smul.addr %s294, 8
          %s296 = scalar_lea.vmem %s2, %s295
        $region104: #{conv_layer_forward.3} parent=23 // pred_fallthru
          _
      $region24: #{conv_layer_forward.3} parent=5 // pred_fallthru
        _
      %p297 = scmp.le.s32.totalorder 1, %s11
      %p298 = scmp.lt.s32.totalorder %s11, 4
      %p299 = pnand %p297, %p298
      %p300 = pneg %p299
      // Predicated region
      $region105: #{conv_layer_forward.3} parent=5 // pred_check
        _
      $region106: #{conv_layer_forward.3} parent=5 // pred_check_branch
        %302 = sbr.rel (%p299) target = $region108
      $region107: #{conv_layer_forward.3} parent=5 // pred_region
        %s303 = ssub.s32 %s11, 1
        %s304 = sand.u32 %s24, 1
        %s305 = sand.u32 %s24, 1
        %s306 = smul.addr %s305, 32
        %s307 = scalar_lea.vmem [#allocation2], %s306
        // Predicated region
        $region109: #{conv_layer_forward.3} parent=107 // pred_check
          %p308 = pneg %p37
        $region110: #{conv_layer_forward.3} parent=107 // pred_check_branch
          %310 = sbr.rel (%p308) target = $region112
        $region111: #{conv_layer_forward.3} parent=107 // pred_region
          _
        $region112: #{conv_layer_forward.3} parent=107 // pred_fallthru
          _
        %s311 = sand.u32 %s50, 1
        %s312 = sand.u32 %s50, 1
        %s313 = smul.addr %s312, 32
        %s314 = scalar_lea.vmem [#allocation3], %s313
        // Predicated region
        $region113: #{conv_layer_forward.3} parent=107 // pred_check
          %p315 = pneg %p63
        $region114: #{conv_layer_forward.3} parent=107 // pred_check_branch
          %317 = sbr.rel (%p315) target = $region116
        $region115: #{conv_layer_forward.3} parent=107 // pred_region
          _
        $region116: #{conv_layer_forward.3} parent=107 // pred_fallthru
          _
        %s318 = sand.u32 %s24, 1
        %s319 = sand.u32 %s24, 1
        %s320 = smul.addr %s319, 32
        %s321 = scalar_lea.vmem [#allocation2], %s320
        %p322 = pneg %p37
        %p323 = pneg %p34
        %s324 = sand.u32 %s50, 1
        %s325 = sand.u32 %s50, 1
        %s326 = smul.addr %s325, 32
        %s327 = scalar_lea.vmem [#allocation3], %s326
        %p328 = pneg %p63
        %p329 = pneg %p60
        %p330 = scmp.lt.s32.totalorder %s16, 2
        %s331 = scalar_select %p330, %s16, 2
        %s332 = smul.addr %s331, 8
        %s333 = scalar_lea.vmem %s2, %s332
        %p334 = pneg %p89
        %p335 = pneg %p86
        %p336 = pneg %p110
        %p337 = pneg %p107
        %p338 = pneg %p131
        %p339 = pneg %p128
        %p340 = pneg %p157
        %p341 = pneg %p154
        %p342 = scmp.lt.s32.totalorder %s16, 2
        %s343 = scalar_select %p342, %s16, 2
        %s344 = smul.addr %s343, 2
        %s345 = scalar_lea.vmem %s5, %s344
        %p346 = scmp.lt.s32.totalorder %s16, 2
        %s347 = scalar_select %p346, %s16, 2
        %s348 = smul.addr %s347, 8
        %s349 = scalar_lea.vmem %s2, %s348
        %p350 = scmp.lt.s32.totalorder %s16, 2
        %s351 = scalar_select %p350, %s16, 2
        %s352 = smul.addr %s351, 2
        %s353 = scalar_lea.vmem %s5, %s352
        %v354 = vld [vmem:[%s307] sm:$0xff]
        %s355 = scalar_lea.vmem %s307, 8 [#allocation2]
        %v356 = vld [vmem:[%s355] sm:$0xff]
        %s357 = scalar_lea.vmem %s307, 16 [#allocation2]
        %v358 = vld [vmem:[%s357] sm:$0xff]
        %s359 = scalar_lea.vmem %s307, 24 [#allocation2]
        %v360 = vld [vmem:[%s359] sm:$0xff]
        %v361 = vld [vmem:[%s314] sm:$0xff]
        %s362 = scalar_lea.vmem %s314, 8 [#allocation3]
        %v363 = vld [vmem:[%s362] sm:$0xff]
        %s364 = scalar_lea.vmem %s314, 16 [#allocation3]
        %v365 = vld [vmem:[%s364] sm:$0xff]
        %s366 = scalar_lea.vmem %s314, 24 [#allocation3]
        %v367 = vld [vmem:[%s366] sm:$0xff]
        %v368 = vld [vmem:[%s3] sm:$0xff]
        %v369 = vld [vmem:[%s3 + $0x8] sm:$0xff]
        %v370 = vld [vmem:[%s3 + $0x10] sm:$0xff]
        %v371 = vld [vmem:[%s3 + $0x18] sm:$0xff]
        %v372 = vld [vmem:[%s4] sm:$0xff]
        %v373 = vld [vmem:[%s4 + $0x8] sm:$0xff]
        %vm374 = vcmask 130048
        %v376 = vsel %vm374, %v361, 0
        %v379 = vsel %vm374, %v363, 0
        %v382 = vsel %vm374, %v365, 0
        %v385 = vsel %vm374, %v367, 0
        %387 = vmatpush.msra.mxu0 0.0
        %388 = vmatpush.msra.mxu0 0.0
        %389 = vmatpush.msra.mxu0 0.0
        %390 = vmatpush.msra.mxu0 0.0
        %391 = vmatpush.msra.mxu0 0.0
        %392 = vmatpush.msra.mxu0 0.0
        %393 = vmatpush.msra.mxu0 0.0
        %394 = vmatpush.msra.mxu0 0.0
        %395 = vmatpush.msra.mxu0 0.0
        %396 = vmatpush.msra.mxu0 0.0
        %397 = vmatpush.msra.mxu0 0.0
        %398 = vmatpush.msra.mxu0 0.0
        %399 = vmatpush.msra.mxu0 0.0
        %400 = vmatpush.msra.mxu0 0.0
        %401 = vmatpush.msra.mxu0 %v373
        %402 = vmatpush.msra.mxu0 %v372
        %403 = vmatmul.f32.gmra.mxu0 %v376
        %v404 = vpop.f32.mrf.mxu0
        %v405 = vadd.f32 0.0, %v404
        %406 = vmatmul.f32.gmra.mxu0 %v379
        %v407 = vpop.f32.mrf.mxu0
        %v408 = vadd.f32 0.0, %v407
        %409 = vmatmul.f32.gmra.mxu0 %v382
        %v410 = vpop.f32.mrf.mxu0
        %v411 = vadd.f32 0.0, %v410
        %412 = vmatmul.f32.gmra.mxu0 %v385
        %v413 = vpop.f32.mrf.mxu0
        %v414 = vadd.f32 0.0, %v413
        %415 = vdwg.mxu0
        %vm416 = vcmask 261120
        %v418 = vsel %vm416, %v354, 0
        %v421 = vsel %vm416, %v356, 0
        %v424 = vsel %vm416, %v358, 0
        %v427 = vsel %vm416, %v360, 0
        %429 = vmatpush.msra.mxu0 0.0
        %430 = vmatpush.msra.mxu0 0.0
        %431 = vmatpush.msra.mxu0 0.0
        %432 = vmatpush.msra.mxu0 0.0
        %433 = vmatpush.msra.mxu0 0.0
        %434 = vmatpush.msra.mxu0 0.0
        %435 = vmatpush.msra.mxu0 0.0
        %436 = vmatpush.msra.mxu0 0.0
        %437 = vmatpush.msra.mxu0 0.0
        %438 = vmatpush.msra.mxu0 0.0
        %439 = vmatpush.msra.mxu0 0.0
        %440 = vmatpush.msra.mxu0 0.0
        %441 = vmatpush.msra.mxu0 %v371
        %442 = vmatpush.msra.mxu0 %v370
        %443 = vmatpush.msra.mxu0 %v369
        %444 = vmatpush.msra.mxu0 %v368
        %445 = vmatmul.f32.gmra.mxu0 %v418
        %v446 = vpop.f32.mrf.mxu0
        %v447 = vadd.f32 %v405, %v446
        %448 = vmatmul.f32.gmra.mxu0 %v421
        %v449 = vpop.f32.mrf.mxu0
        %v450 = vadd.f32 %v408, %v449
        %451 = vmatmul.f32.gmra.mxu0 %v424
        %v452 = vpop.f32.mrf.mxu0
        %v453 = vadd.f32 %v411, %v452
        %454 = vmatmul.f32.gmra.mxu0 %v427
        %v455 = vpop.f32.mrf.mxu0
        %v456 = vadd.f32 %v414, %v455
        %457 = vdwg.mxu0
        %v458 = vld [vmem:[%s349] sm:$0xff]
        %v459 = vadd.f32 %v447, %v458
        %vm460 = vcmask 523264
        %v461 = vsel %vm460, %v459, 0.0
        %v462 = vrot.slane %v461, 4
        %v463 = vadd.f32 %v461, %v462
        %v464 = vrot.slane %v463, 2
        %v465 = vadd.f32 %v463, %v464
        %v466 = vrot.slane %v465, 1
        %v467 = vadd.f32 %v465, %v466
        %v468 = vadd.f32 %v467, 0.0
        %v469 = vmul.f32 %v459, %v459
        %v470 = vsel %vm460, %v469, 0.0
        %v471 = vrot.slane %v470, 4
        %v472 = vadd.f32 %v470, %v471
        %v473 = vrot.slane %v472, 2
        %v474 = vadd.f32 %v472, %v473
        %v475 = vrot.slane %v474, 1
        %v476 = vadd.f32 %v474, %v475
        %v477 = vadd.f32 %v476, 0.0
        %v478 = vadd.f32 %v450, %v458
        %v479 = vsel %vm460, %v478, 0.0
        %v480 = vrot.slane %v479, 4
        %v481 = vadd.f32 %v479, %v480
        %v482 = vrot.slane %v481, 2
        %v483 = vadd.f32 %v481, %v482
        %v484 = vrot.slane %v483, 1
        %v485 = vadd.f32 %v483, %v484
        %v486 = vadd.f32 %v468, %v485
        %v487 = vmul.f32 %v478, %v478
        %v488 = vsel %vm460, %v487, 0.0
        %v489 = vrot.slane %v488, 4
        %v490 = vadd.f32 %v488, %v489
        %v491 = vrot.slane %v490, 2
        %v492 = vadd.f32 %v490, %v491
        %v493 = vrot.slane %v492, 1
        %v494 = vadd.f32 %v492, %v493
        %v495 = vadd.f32 %v477, %v494
        %v496 = vadd.f32 %v453, %v458
        %v497 = vsel %vm460, %v496, 0.0
        %v498 = vrot.slane %v497, 4
        %v499 = vadd.f32 %v497, %v498
        %v500 = vrot.slane %v499, 2
        %v501 = vadd.f32 %v499, %v500
        %v502 = vrot.slane %v501, 1
        %v503 = vadd.f32 %v501, %v502
        %v504 = vadd.f32 %v486, %v503
        %v505 = vmul.f32 %v496, %v496
        %v506 = vsel %vm460, %v505, 0.0
        %v507 = vrot.slane %v506, 4
        %v508 = vadd.f32 %v506, %v507
        %v509 = vrot.slane %v508, 2
        %v510 = vadd.f32 %v508, %v509
        %v511 = vrot.slane %v510, 1
        %v512 = vadd.f32 %v510, %v511
        %v513 = vadd.f32 %v495, %v512
        %v514 = vadd.f32 %v456, %v458
        %v515 = vsel %vm460, %v514, 0.0
        %v516 = vrot.slane %v515, 4
        %v517 = vadd.f32 %v515, %v516
        %v518 = vrot.slane %v517, 2
        %v519 = vadd.f32 %v517, %v518
        %v520 = vrot.slane %v519, 1
        %v521 = vadd.f32 %v519, %v520
        %v522 = vadd.f32 %v504, %v521
        %v523 = vmul.f32 %v514, %v514
        %v524 = vsel %vm460, %v523, 0.0
        %v525 = vrot.slane %v524, 4
        %v526 = vadd.f32 %v524, %v525
        %v527 = vrot.slane %v526, 2
        %v528 = vadd.f32 %v526, %v527
        %v529 = vrot.slane %v528, 1
        %v530 = vadd.f32 %v528, %v529
        %v531 = vadd.f32 %v513, %v530
        %vm532 = vcmask 1040384
        %v533 = vsel %vm532, %v522, %v531
        %vm534 = vcmask 517120
        %535 = vst.msk [vmem:[%s353] sm:$0x3] %vm534, %v533
        %p536 = scmp.lt.s32.totalorder %s16, 2
        %s537 = scalar_select %p536, %s16, 2
        %s538 = smul.addr %s537, 2
        %s539 = scalar_lea.vmem %s5, %s538
        // Predicated region
        $region117: #{conv_layer_forward.3} parent=107 // pred_check
          %p540 = pneg %p154
        $region118: #{conv_layer_forward.3} parent=107 // pred_check_branch
          %542 = sbr.rel (%p540) target = $region120
        $region119: #{conv_layer_forward.3} parent=107 // pred_region
          _
        $region120: #{conv_layer_forward.3} parent=107 // pred_fallthru
          _
      $region108: #{conv_layer_forward.3} parent=5 // pred_fallthru
        _
      %p543 = scmp.le.s32.totalorder 2, %s11
      // Predicated region
      $region121: #{conv_layer_forward.3} parent=5 // pred_check
        %p544 = pneg %p543
      $region122: #{conv_layer_forward.3} parent=5 // pred_check_branch
        %546 = sbr.rel (%p544) target = $region124
      $region123: #{conv_layer_forward.3} parent=5 // pred_region
        %s547 = ssub.s32 %s11, 2
        // Predicated region
        $region125: #{conv_layer_forward.3} parent=123 // pred_check
          %p548 = pneg %p160
        $region126: #{conv_layer_forward.3} parent=123 // pred_check_branch
          %550 = sbr.rel (%p548) target = $region128
        $region127: #{conv_layer_forward.3} parent=123 // pred_region
          %p551 = scmp.lt.s32.totalorder %s17, 2
          %s552 = scalar_select %p551, %s17, 2
          %s553 = smul.addr %s552, 2
          %s554 = scalar_lea.vmem %s5, %s553
        $region128: #{conv_layer_forward.3} parent=123 // pred_fallthru
          _
      $region124: #{conv_layer_forward.3} parent=5 // pred_fallthru
        _
    $region6: #{conv_layer_forward.3} parent=1 // loop_footer
      %s15 = sadd.s32 1, %s11
    $region7: #{conv_layer_forward.3} parent=1 // loop_footer_branch
      %10 = sbr.rel target = $region3
    $region8: #{conv_layer_forward.3} parent=1 // loop_exit
      _

// kernel: conv_layer_forward.4
$region0: #{conv_layer_forward.4}
  #allocation0 [shape = 'u32[]', space=smem, size = 0x4, offset = 0x4, fixed_abs, tag = 'smem constant byte address 0x4 - core index']
  #allocation1 [shape = 'u32[72,128]{1,0:T(1,128)}', space=vmem, size = 0x9000, scoped, tag = 'internal scratch']
  %s0 = inlined_call_operand.vmem [shape: f32[4,24,32], index: 0, kind: input, shape index: {}]
  %s1 = inlined_call_operand.vmem [shape: f32[4,24,16], index: 1, kind: input, shape index: {}]
  %s2 = inlined_call_operand.vmem [shape: f32[24,64], index: 2, kind: input, shape index: {}]
  %s3 = inlined_call_operand.vmem [shape: f32[32,64], index: 3, kind: input, shape index: {}]
  %s4 = inlined_call_operand.vmem [shape: f32[16,64], index: 4, kind: input, shape index: {}]
  %s5 = inlined_call_operand.vmem [shape: f32[2,64], index: 5, kind: input, shape index: {}]
  %s6 = inlined_call_operand.vmem [shape: f32[24,32], index: 6, kind: output, shape index: {0}]
  %s7 = inlined_call_operand.vmem [shape: f32[3,2,32], index: 7, kind: output, shape index: {1}]
  %8 = xla_tuple %s6, %s7
  %s9 = sld [smem:[#allocation0]]
  $region141: #{conv_layer_forward.4} parent=0
    _
  %s11 = ssub.s32 1, %s9
  %s12 = scalar_select 0, %s11, %s9
  $region1: #{conv_layer_forward.4} parent=0
    #allocation2 [shape = 'u8[32768]{0}', space=vmem, size = 0x8000, scoped, tag = 'input window, operand 0']
    #allocation3 [shape = 'u8[32768]{0}', space=vmem, size = 0x8000, scoped, tag = 'input window, operand 1']
    loop: start=0, step=1, limit=5
    $region2: #{conv_layer_forward.4} parent=1 // loop_pre_header
      _
    $region3: #{conv_layer_forward.4} parent=1 // loop_header
      %s14 = sphi 0, %s18
      %p15 = scmp.ge.s32.totalorder %s14, 5
      %s24 = sphi 0, %s26
      %s27 = sphi 0, %s24
      %s28 = sphi 0, %s27
      %s44 = sphi 0, %s28
      %s50 = sphi 0, %s52
      %s53 = sphi 0, %s50
      %s54 = sphi 0, %s53
      %s70 = sphi 0, %s54
      %s76 = sphi 0, %s78
      %s79 = sphi 0, %s76
      %s80 = sphi 0, %s79
      %s96 = sphi 0, %s80
      %s100 = sphi 0, %s100
      %s102 = sphi 0, %s100
      %s103 = sphi 0, %s102
      %s117 = sphi 0, %s103
      %s121 = sphi 0, %s121
      %s123 = sphi 0, %s121
      %s124 = sphi 0, %s123
      %s138 = sphi 0, %s124
      %s142 = sphi 0, %s142
      %s144 = sphi 0, %s142
      %s145 = sphi 0, %s144
      %s159 = sphi 0, %s145
      %s165 = sphi 0, %s167
      %s168 = sphi 0, %s165
      %s169 = sphi 0, %s168
      %s185 = sphi 0, %s169
      %s191 = sphi 0, %s193
      %s194 = sphi 0, %s191
      %s195 = sphi 0, %s194
      %s211 = sphi 0, %s195
    $region4: #{conv_layer_forward.4} parent=1 // loop_header_branch
      %17 = sbr.rel (%p15) target = $region8
    $region5: #{conv_layer_forward.4} parent=1 // loop_body
      %s19 = ssub.s32 %s14, 1
      %s20 = ssub.s32 %s14, 2
      %s21 = sadd.s32 %s14, 1
      %s22 = ssub.s32 %s14, %s21
      %p23 = scmp.eq.s32.totalorder %s22, 0
      %s25 = sadd.s32 %s24, 1
      %s26 = scalar_select %p23, %s24, %s25
      %p29 = pneg %p23
      %p30 = scmp.eq.s32.totalorder %s14, 2
      %p31 = por %p29, %p30
      %p32 = scmp.ne.s32.totalorder %s24, %s27
      %p33 = scmp.eq.s32.totalorder %s14, 0
      %p34 = por %p32, %p33
      %p35 = scmp.ne.s32.totalorder %s24, %s27
      %p36 = scmp.eq.s32.totalorder %s19, 2
      %p37 = por %p35, %p36
      %p38 = scmp.ne.s32.totalorder %s27, %s28
      %p39 = scmp.eq.s32.totalorder %s19, 0
      %p40 = por %p38, %p39
      %p41 = scmp.ne.s32.totalorder %s27, %s28
      %p42 = scmp.eq.s32.totalorder %s20, 2
      %p43 = por %p41, %p42
      %p45 = scmp.ne.s32.totalorder %s28, %s44
      %p46 = scmp.eq.s32.totalorder %s20, 0
      %p47 = por %p45, %p46
      %s48 = ssub.s32 %s14, %s21
      %p49 = scmp.eq.s32.totalorder %s48, 0
      %s51 = sadd.s32 %s50, 1
      %s52 = scalar_select %p49, %s50, %s51
      %p55 = pneg %p49
      %p56 = scmp.eq.s32.totalorder %s14, 2
      %p57 = por %p55, %p56
      %p58 = scmp.ne.s32.totalorder %s50, %s53
      %p59 = scmp.eq.s32.totalorder %s14, 0
      %p60 = por %p58, %p59
      %p61 = scmp.ne.s32.totalorder %s50, %s53
      %p62 = scmp.eq.s32.totalorder %s19, 2
      %p63 = por %p61, %p62
      %p64 = scmp.ne.s32.totalorder %s53, %s54
      %p65 = scmp.eq.s32.totalorder %s19, 0
      %p66 = por %p64, %p65
      %p67 = scmp.ne.s32.totalorder %s53, %s54
      %p68 = scmp.eq.s32.totalorder %s20, 2
      %p69 = por %p67, %p68
      %p71 = scmp.ne.s32.totalorder %s54, %s70
      %p72 = scmp.eq.s32.totalorder %s20, 0
      %p73 = por %p71, %p72
      %s74 = ssub.s32 %s14, %s21
      %p75 = scmp.eq.s32.totalorder %s74, 0
      %s77 = sadd.s32 %s76, 1
      %s78 = scalar_select %p75, %s76, %s77
      %p81 = pneg %p75
      %p82 = scmp.eq.s32.totalorder %s14, 2
      %p83 = por %p81, %p82
      %p84 = scmp.ne.s32.totalorder %s76, %s79
      %p85 = scmp.eq.s32.totalorder %s14, 0
      %p86 = por %p84, %p85
      %p87 = scmp.ne.s32.totalorder %s76, %s79
      %p88 = scmp.eq.s32.totalorder %s19, 2
      %p89 = por %p87, %p88
      %p90 = scmp.ne.s32.totalorder %s79, %s80
      %p91 = scmp.eq.s32.totalorder %s19, 0
      %p92 = por %p90, %p91
      %p93 = scmp.ne.s32.totalorder %s79, %s80
      %p94 = scmp.eq.s32.totalorder %s20, 2
      %p95 = por %p93, %p94
      %p97 = scmp.ne.s32.totalorder %s80, %s96
      %p98 = scmp.eq.s32.totalorder %s20, 0
      %p99 = por %p97, %p98
      %s101 = sadd.s32 %s100, 1
      %p104 = scmp.eq.s32.totalorder %s14, 2
      %p105 = scmp.ne.s32.totalorder %s100, %s102
      %p106 = scmp.eq.s32.totalorder %s14, 0
      %p107 = por %p105, %p106
      %p108 = scmp.ne.s32.totalorder %s100, %s102
      %p109 = scmp.eq.s32.totalorder %s19, 2
      %p110 = por %p108, %p109
      %p111 = scmp.ne.s32.totalorder %s102, %s103
      %p112 = scmp.eq.s32.totalorder %s19, 0
      %p113 = por %p111, %p112
      %p114 = scmp.ne.s32.totalorder %s102, %s103
      %p115 = scmp.eq.s32.totalorder %s20, 2
      %p116 = por %p114, %p115
      %p118 = scmp.ne.s32.totalorder %s103, %s117
      %p119 = scmp.eq.s32.totalorder %s20, 0
      %p120 = por %p118, %p119
      %s122 = sadd.s32 %s121, 1
      %p125 = scmp.eq.s32.totalorder %s14, 2
      %p126 = scmp.ne.s32.totalorder %s121, %s123
      %p127 = scmp.eq.s32.totalorder %s14, 0
      %p128 = por %p126, %p127
      %p129 = scmp.ne.s32.totalorder %s121, %s123
      %p130 = scmp.eq.s32.totalorder %s19, 2
      %p131 = por %p129, %p130
      %p132 = scmp.ne.s32.totalorder %s123, %s124
      %p133 = scmp.eq.s32.totalorder %s19, 0
      %p134 = por %p132, %p133
      %p135 = scmp.ne.s32.totalorder %s123, %s124
      %p136 = scmp.eq.s32.totalorder %s20, 2
      %p137 = por %p135, %p136
      %p139 = scmp.ne.s32.totalorder %s124, %s138
      %p140 = scmp.eq.s32.totalorder %s20, 0
      %p141 = por %p139, %p140
      %s143 = sadd.s32 %s142, 1
      %p146 = scmp.eq.s32.totalorder %s14, 2
      %p147 = scmp.ne.s32.totalorder %s142, %s144
      %p148 = scmp.eq.s32.totalorder %s14, 0
      %p149 = por %p147, %p148
      %p150 = scmp.ne.s32.totalorder %s142, %s144
      %p151 = scmp.eq.s32.totalorder %s19, 2
      %p152 = por %p150, %p151
      %p153 = scmp.ne.s32.totalorder %s144, %s145
      %p154 = scmp.eq.s32.totalorder %s19, 0
      %p155 = por %p153, %p154
      %p156 = scmp.ne.s32.totalorder %s144, %s145
      %p157 = scmp.eq.s32.totalorder %s20, 2
      %p158 = por %p156, %p157
      %p160 = scmp.ne.s32.totalorder %s145, %s159
      %p161 = scmp.eq.s32.totalorder %s20, 0
      %p162 = por %p160, %p161
      %s163 = ssub.s32 %s14, %s21
      %p164 = scmp.eq.s32.totalorder %s163, 0
      %s166 = sadd.s32 %s165, 1
      %s167 = scalar_select %p164, %s165, %s166
      %p170 = pneg %p164
      %p171 = scmp.eq.s32.totalorder %s14, 2
      %p172 = por %p170, %p171
      %p173 = scmp.ne.s32.totalorder %s165, %s168
      %p174 = scmp.eq.s32.totalorder %s14, 0
      %p175 = por %p173, %p174
      %p176 = scmp.ne.s32.totalorder %s165, %s168
      %p177 = scmp.eq.s32.totalorder %s19, 2
      %p178 = por %p176, %p177
      %p179 = scmp.ne.s32.totalorder %s168, %s169
      %p180 = scmp.eq.s32.totalorder %s19, 0
      %p181 = por %p179, %p180
      %p182 = scmp.ne.s32.totalorder %s168, %s169
      %p183 = scmp.eq.s32.totalorder %s20, 2
      %p184 = por %p182, %p183
      %p186 = scmp.ne.s32.totalorder %s169, %s185
      %p187 = scmp.eq.s32.totalorder %s20, 0
      %p188 = por %p186, %p187
      %s189 = ssub.s32 %s14, %s21
      %p190 = scmp.eq.s32.totalorder %s189, 0
      %s192 = sadd.s32 %s191, 1
      %s193 = scalar_select %p190, %s191, %s192
      %p196 = pneg %p190
      %p197 = scmp.eq.s32.totalorder %s14, 2
      %p198 = por %p196, %p197
      %p199 = scmp.ne.s32.totalorder %s191, %s194
      %p200 = scmp.eq.s32.totalorder %s14, 0
      %p201 = por %p199, %p200
      %p202 = scmp.ne.s32.totalorder %s191, %s194
      %p203 = scmp.eq.s32.totalorder %s19, 2
      %p204 = por %p202, %p203
      %p205 = scmp.ne.s32.totalorder %s194, %s195
      %p206 = scmp.eq.s32.totalorder %s19, 0
      %p207 = por %p205, %p206
      %p208 = scmp.ne.s32.totalorder %s194, %s195
      %p209 = scmp.eq.s32.totalorder %s20, 2
      %p210 = por %p208, %p209
      %p212 = scmp.ne.s32.totalorder %s195, %s211
      %p213 = scmp.eq.s32.totalorder %s20, 0
      %p214 = por %p212, %p213
      %p215 = scmp.le.s32.totalorder 1, %s14
      %p216 = scmp.lt.s32.totalorder %s14, 4
      %p217 = pnand %p215, %p216
      %p218 = pneg %p217
      // Predicated region
      $region9: #{conv_layer_forward.4} parent=5 // pred_check
        _
      $region10: #{conv_layer_forward.4} parent=5 // pred_check_branch
        %220 = sbr.rel (%p217) target = $region12
      $region11: #{conv_layer_forward.4} parent=5 // pred_region
        %s221 = ssub.s32 %s14, 1
        // Predicated region
        $region13: #{conv_layer_forward.4} parent=11 // pred_check
          %p222 = pneg %p113
        $region14: #{conv_layer_forward.4} parent=11 // pred_check_branch
          %224 = sbr.rel (%p222) target = $region16
        $region15: #{conv_layer_forward.4} parent=11 // pred_region
          _
        $region16: #{conv_layer_forward.4} parent=11 // pred_fallthru
          _
        // Predicated region
        $region17: #{conv_layer_forward.4} parent=11 // pred_check
          %p225 = pneg %p134
        $region18: #{conv_layer_forward.4} parent=11 // pred_check_branch
          %227 = sbr.rel (%p225) target = $region20
        $region19: #{conv_layer_forward.4} parent=11 // pred_region
          _
        $region20: #{conv_layer_forward.4} parent=11 // pred_fallthru
          _
        // Predicated region
        $region21: #{conv_layer_forward.4} parent=11 // pred_check
          %p228 = pneg %p155
        $region22: #{conv_layer_forward.4} parent=11 // pred_check_branch
          %230 = sbr.rel (%p228) target = $region24
        $region23: #{conv_layer_forward.4} parent=11 // pred_region
          _
        $region24: #{conv_layer_forward.4} parent=11 // pred_fallthru
          _
      $region12: #{conv_layer_forward.4} parent=5 // pred_fallthru
        _
      %p231 = scmp.lt.s32.totalorder %s14, 3
      // Predicated region
      $region25: #{conv_layer_forward.4} parent=5 // pred_check
        %p232 = pneg %p231
      $region26: #{conv_layer_forward.4} parent=5 // pred_check_branch
        %234 = sbr.rel (%p232) target = $region28
      $region27: #{conv_layer_forward.4} parent=5 // pred_region
        // Predicated region
        $region29: #{conv_layer_forward.4} parent=27 // pred_check
          %p235 = pneg %p34
        $region30: #{conv_layer_forward.4} parent=27 // pred_check_branch
          %237 = sbr.rel (%p235) target = $region32
        $region31: #{conv_layer_forward.4} parent=27 // pred_region
          %s238 = sand.u32 %s24, 1
          %s239 = sand.u32 %s24, 1
          %s240 = smul.addr %s239, 32
          %s241 = scalar_lea.vmem [#allocation2], %s240
          %s242 = smul.addr %s14, 8
          %s243 = scalar_lea.vmem %s0, %s242
          // Predicated region
          $region33: #{conv_layer_forward.4} parent=31 // pred_check
            _
          $region34: #{conv_layer_forward.4} parent=31 // pred_check_branch
            %245 = sbr.rel (0) target = $region36
          $region35: #{conv_layer_forward.4} parent=31 // pred_region
            // Predicated region
            $region37: #{conv_layer_forward.4} parent=35 // pred_check
              _
            $region38: #{conv_layer_forward.4} parent=35 // pred_check_branch
              %247 = sbr.rel (0) target = $region40
            $region39: #{conv_layer_forward.4} parent=35 // pred_region
              // Predicated region
              $region52: #{conv_layer_forward.4} parent=39 // pred_check
                _
              $region53: #{conv_layer_forward.4} parent=39 // pred_check_branch
                %269 = sbr.rel (0) target = $region55
              $region54: #{conv_layer_forward.4} parent=39 // pred_region
                loop: start=0, step=1, limit=1
                $region56: #{conv_layer_forward.4} parent=54 // loop_pre_header
                  _
                $region57: #{conv_layer_forward.4} parent=54 // loop_header
                  %s271 = sphi 0, %s275
                  %p272 = scmp.ge.s32.totalorder %s271, 1
                  %s276 = sphi %s243, %s243
                  %s277 = sphi %s241, %s241
                $region58: #{conv_layer_forward.4} parent=54 // loop_header_branch
                  %274 = sbr.rel (%p272) target = $region62
                $region59: #{conv_layer_forward.4} parent=54 // loop_body
                  %v278 = vld [vmem:[%s276] sm:$0xff]
                  %279 = vst [vmem:[%s277] sm:$0xff] %v278
                  %v280 = vld [vmem:[%s276 + $0x18] sm:$0xff]
                  %281 = vst [vmem:[%s277 + $0x8] sm:$0xff] %v280
                  %v282 = vld [vmem:[%s276 + $0x30] sm:$0xff]
                  %283 = vst [vmem:[%s277 + $0x10] sm:$0xff] %v282
                  %v284 = vld [vmem:[%s276 + $0x48] sm:$0xff]
                  %285 = vst [vmem:[%s277 + $0x18] sm:$0xff] %v284
                $region60: #{conv_layer_forward.4} parent=54 // loop_footer
                  %s275 = sadd.s32 1, %s271
                $region61: #{conv_layer_forward.4} parent=54 // loop_footer_branch
                  %270 = sbr.rel target = $region57
                $region62: #{conv_layer_forward.4} parent=54 // loop_exit
                  _
              $region55: #{conv_layer_forward.4} parent=39 // pred_fallthru
                _
              // Predicated region
              $region63: #{conv_layer_forward.4} parent=39 // pred_check
                _
              $region64: #{conv_layer_forward.4} parent=39 // pred_check_branch
                %287 = sbr.rel target = $region66
              $region65: #{conv_layer_forward.4} parent=39 // pred_region
                _
              $region66: #{conv_layer_forward.4} parent=39 // pred_fallthru
                _
            $region40: #{conv_layer_forward.4} parent=35 // pred_fallthru
              _
            // Predicated region
            $region41: #{conv_layer_forward.4} parent=35 // pred_check
              _
            $region42: #{conv_layer_forward.4} parent=35 // pred_check_branch
              %249 = sbr.rel target = $region44
            $region43: #{conv_layer_forward.4} parent=35 // pred_region
              %s251 = ssub.s32 256, 1
              loop: start=0, step=1, limit=1
              $region45: #{conv_layer_forward.4} parent=43 // loop_pre_header
                _
              $region46: #{conv_layer_forward.4} parent=43 // loop_header
                %s253 = sphi 0, %s257
                %p254 = scmp.ge.s32.totalorder %s253, 1
                %s258 = sphi %s243, %s243
                %s259 = sphi %s241, %s241
              $region47: #{conv_layer_forward.4} parent=43 // loop_header_branch
                %256 = sbr.rel (%p254) target = $region51
              $region48: #{conv_layer_forward.4} parent=43 // loop_body
                %v260 = vld [vmem:[%s258] sm:%s251]
                %261 = vst [vmem:[%s259] sm:%s251] %v260
                %v262 = vld [vmem:[%s258 + $0x18] sm:%s251]
                %263 = vst [vmem:[%s259 + $0x8] sm:%s251] %v262
                %v264 = vld [vmem:[%s258 + $0x30] sm:%s251]
                %265 = vst [vmem:[%s259 + $0x10] sm:%s251] %v264
                %v266 = vld [vmem:[%s258 + $0x48] sm:%s251]
                %267 = vst [vmem:[%s259 + $0x18] sm:%s251] %v266
              $region49: #{conv_layer_forward.4} parent=43 // loop_footer
                %s257 = sadd.s32 1, %s253
              $region50: #{conv_layer_forward.4} parent=43 // loop_footer_branch
                %252 = sbr.rel target = $region46
              $region51: #{conv_layer_forward.4} parent=43 // loop_exit
                _
            $region44: #{conv_layer_forward.4} parent=35 // pred_fallthru
              _
          $region36: #{conv_layer_forward.4} parent=31 // pred_fallthru
            _
          %288 = vnop
        $region32: #{conv_layer_forward.4} parent=27 // pred_fallthru
          _
        // Predicated region
        $region67: #{conv_layer_forward.4} parent=27 // pred_check
          %p289 = pneg %p60
        $region68: #{conv_layer_forward.4} parent=27 // pred_check_branch
          %291 = sbr.rel (%p289) target = $region70
        $region69: #{conv_layer_forward.4} parent=27 // pred_region
          %s292 = sand.u32 %s50, 1
          %s293 = sand.u32 %s50, 1
          %s294 = smul.addr %s293, 32
          %s295 = scalar_lea.vmem [#allocation3], %s294
          %s296 = smul.addr %s14, 8
          %s297 = scalar_lea.vmem %s1, %s296
          // Predicated region
          $region71: #{conv_layer_forward.4} parent=69 // pred_check
            _
          $region72: #{conv_layer_forward.4} parent=69 // pred_check_branch
            %299 = sbr.rel (0) target = $region74
          $region73: #{conv_layer_forward.4} parent=69 // pred_region
            // Predicated region
            $region75: #{conv_layer_forward.4} parent=73 // pred_check
              _
            $region76: #{conv_layer_forward.4} parent=73 // pred_check_branch
              %301 = sbr.rel (0) target = $region78
            $region77: #{conv_layer_forward.4} parent=73 // pred_region
              // Predicated region
              $region90: #{conv_layer_forward.4} parent=77 // pred_check
                _
              $region91: #{conv_layer_forward.4} parent=77 // pred_check_branch
                %323 = sbr.rel (0) target = $region93
              $region92: #{conv_layer_forward.4} parent=77 // pred_region
                loop: start=0, step=1, limit=1
                $region94: #{conv_layer_forward.4} parent=92 // loop_pre_header
                  _
                $region95: #{conv_layer_forward.4} parent=92 // loop_header
                  %s325 = sphi 0, %s329
                  %p326 = scmp.ge.s32.totalorder %s325, 1
                  %s330 = sphi %s297, %s297
                  %s331 = sphi %s295, %s295
                $region96: #{conv_layer_forward.4} parent=92 // loop_header_branch
                  %328 = sbr.rel (%p326) target = $region100
                $region97: #{conv_layer_forward.4} parent=92 // loop_body
                  %v332 = vld [vmem:[%s330] sm:$0xff]
                  %333 = vst [vmem:[%s331] sm:$0xff] %v332
                  %v334 = vld [vmem:[%s330 + $0x18] sm:$0xff]
                  %335 = vst [vmem:[%s331 + $0x8] sm:$0xff] %v334
                  %v336 = vld [vmem:[%s330 + $0x30] sm:$0xff]
                  %337 = vst [vmem:[%s331 + $0x10] sm:$0xff] %v336
                  %v338 = vld [vmem:[%s330 + $0x48] sm:$0xff]
                  %339 = vst [vmem:[%s331 + $0x18] sm:$0xff] %v338
                $region98: #{conv_layer_forward.4} parent=92 // loop_footer
                  %s329 = sadd.s32 1, %s325
                $region99: #{conv_layer_forward.4} parent=92 // loop_footer_branch
                  %324 = sbr.rel target = $region95
                $region100: #{conv_layer_forward.4} parent=92 // loop_exit
                  _
              $region93: #{conv_layer_forward.4} parent=77 // pred_fallthru
                _
              // Predicated region
              $region101: #{conv_layer_forward.4} parent=77 // pred_check
                _
              $region102: #{conv_layer_forward.4} parent=77 // pred_check_branch
                %341 = sbr.rel target = $region104
              $region103: #{conv_layer_forward.4} parent=77 // pred_region
                _
              $region104: #{conv_layer_forward.4} parent=77 // pred_fallthru
                _
            $region78: #{conv_layer_forward.4} parent=73 // pred_fallthru
              _
            // Predicated region
            $region79: #{conv_layer_forward.4} parent=73 // pred_check
              _
            $region80: #{conv_layer_forward.4} parent=73 // pred_check_branch
              %303 = sbr.rel target = $region82
            $region81: #{conv_layer_forward.4} parent=73 // pred_region
              %s305 = ssub.s32 256, 1
              loop: start=0, step=1, limit=1
              $region83: #{conv_layer_forward.4} parent=81 // loop_pre_header
                _
              $region84: #{conv_layer_forward.4} parent=81 // loop_header
                %s307 = sphi 0, %s311
                %p308 = scmp.ge.s32.totalorder %s307, 1
                %s312 = sphi %s297, %s297
                %s313 = sphi %s295, %s295
              $region85: #{conv_layer_forward.4} parent=81 // loop_header_branch
                %310 = sbr.rel (%p308) target = $region89
              $region86: #{conv_layer_forward.4} parent=81 // loop_body
                %v314 = vld [vmem:[%s312] sm:%s305]
                %315 = vst [vmem:[%s313] sm:%s305] %v314
                %v316 = vld [vmem:[%s312 + $0x18] sm:%s305]
                %317 = vst [vmem:[%s313 + $0x8] sm:%s305] %v316
                %v318 = vld [vmem:[%s312 + $0x30] sm:%s305]
                %319 = vst [vmem:[%s313 + $0x10] sm:%s305] %v318
                %v320 = vld [vmem:[%s312 + $0x48] sm:%s305]
                %321 = vst [vmem:[%s313 + $0x18] sm:%s305] %v320
              $region87: #{conv_layer_forward.4} parent=81 // loop_footer
                %s311 = sadd.s32 1, %s307
              $region88: #{conv_layer_forward.4} parent=81 // loop_footer_branch
                %306 = sbr.rel target = $region84
              $region89: #{conv_layer_forward.4} parent=81 // loop_exit
                _
            $region82: #{conv_layer_forward.4} parent=73 // pred_fallthru
              _
          $region74: #{conv_layer_forward.4} parent=69 // pred_fallthru
            _
          %342 = vnop
        $region70: #{conv_layer_forward.4} parent=27 // pred_fallthru
          _
        // Predicated region
        $region105: #{conv_layer_forward.4} parent=27 // pred_check
          %p343 = pneg %p86
        $region106: #{conv_layer_forward.4} parent=27 // pred_check_branch
          %345 = sbr.rel (%p343) target = $region108
        $region107: #{conv_layer_forward.4} parent=27 // pred_region
          %p346 = scmp.lt.s32.totalorder %s14, 2
          %s347 = scalar_select %p346, %s14, 2
          %s348 = smul.addr %s347, 8
          %s349 = scalar_lea.vmem %s2, %s348
        $region108: #{conv_layer_forward.4} parent=27 // pred_fallthru
          _
      $region28: #{conv_layer_forward.4} parent=5 // pred_fallthru
        _
      %p350 = scmp.le.s32.totalorder 1, %s14
      %p351 = scmp.lt.s32.totalorder %s14, 4
      %p352 = pnand %p350, %p351
      %p353 = pneg %p352
      // Predicated region
      $region109: #{conv_layer_forward.4} parent=5 // pred_check
        _
      $region110: #{conv_layer_forward.4} parent=5 // pred_check_branch
        %355 = sbr.rel (%p352) target = $region112
      $region111: #{conv_layer_forward.4} parent=5 // pred_region
        %s356 = ssub.s32 %s14, 1
        %s357 = sand.u32 %s27, 1
        %s358 = sand.u32 %s27, 1
        %s359 = smul.addr %s358, 32
        %s360 = scalar_lea.vmem [#allocation2], %s359
        // Predicated region
        $region113: #{conv_layer_forward.4} parent=111 // pred_check
          %p361 = pneg %p40
        $region114: #{conv_layer_forward.4} parent=111 // pred_check_branch
          %363 = sbr.rel (%p361) target = $region116
        $region115: #{conv_layer_forward.4} parent=111 // pred_region
          _
        $region116: #{conv_layer_forward.4} parent=111 // pred_fallthru
          _
        %s364 = sand.u32 %s53, 1
        %s365 = sand.u32 %s53, 1
        %s366 = smul.addr %s365, 32
        %s367 = scalar_lea.vmem [#allocation3], %s366
        // Predicated region
        $region117: #{conv_layer_forward.4} parent=111 // pred_check
          %p368 = pneg %p66
        $region118: #{conv_layer_forward.4} parent=111 // pred_check_branch
          %370 = sbr.rel (%p368) target = $region120
        $region119: #{conv_layer_forward.4} parent=111 // pred_region
          _
        $region120: #{conv_layer_forward.4} parent=111 // pred_fallthru
          _
        %s371 = sand.u32 %s27, 1
        %s372 = sand.u32 %s27, 1
        %s373 = smul.addr %s372, 32
        %s374 = scalar_lea.vmem [#allocation2], %s373
        %p375 = pneg %p40
        %p376 = pneg %p37
        %s377 = sand.u32 %s53, 1
        %s378 = sand.u32 %s53, 1
        %s379 = smul.addr %s378, 32
        %s380 = scalar_lea.vmem [#allocation3], %s379
        %p381 = pneg %p66
        %p382 = pneg %p63
        %p383 = scmp.lt.s32.totalorder %s19, 2
        %s384 = scalar_select %p383, %s19, 2
        %s385 = smul.addr %s384, 8
        %s386 = scalar_lea.vmem %s2, %s385
        %p387 = pneg %p92
        %p388 = pneg %p89
        %p389 = pneg %p113
        %p390 = pneg %p110
        %p391 = pneg %p134
        %p392 = pneg %p131
        %p393 = pneg %p155
        %p394 = pneg %p152
        %p395 = pneg %p181
        %p396 = pneg %p178
        %p397 = scmp.lt.s32.totalorder %s19, 2
        %s398 = scalar_select %p397, %s19, 2
        %s399 = smul.addr %s398, 8
        %s400 = scalar_lea.vmem %s6, %s399
        %p401 = pneg %p207
        %p402 = pneg %p204
        %p403 = scmp.lt.s32.totalorder %s19, 2
        %s404 = scalar_select %p403, %s19, 2
        %s405 = smul.addr %s404, 2
        %s406 = scalar_lea.vmem %s7, %s405
        %p407 = scmp.lt.s32.totalorder %s19, 2
        %s408 = scalar_select %p407, %s19, 2
        %s409 = smul.addr %s408, 8
        %s410 = scalar_lea.vmem %s2, %s409
        %p411 = scmp.lt.s32.totalorder %s19, 2
        %s412 = scalar_select %p411, %s19, 2
        %s413 = smul.addr %s412, 8
        %s414 = scalar_lea.vmem %s6, %s413
        %p415 = scmp.lt.s32.totalorder %s19, 2
        %s416 = scalar_select %p415, %s19, 2
        %s417 = smul.addr %s416, 2
        %s418 = scalar_lea.vmem %s7, %s417
        %v419 = vld [vmem:[%s360] sm:$0xff]
        %s420 = scalar_lea.vmem %s360, 8 [#allocation2]
        %v421 = vld [vmem:[%s420] sm:$0xff]
        %s422 = scalar_lea.vmem %s360, 16 [#allocation2]
        %v423 = vld [vmem:[%s422] sm:$0xff]
        %s424 = scalar_lea.vmem %s360, 24 [#allocation2]
        %v425 = vld [vmem:[%s424] sm:$0xff]
        %v426 = vld [vmem:[%s367] sm:$0xff]
        %s427 = scalar_lea.vmem %s367, 8 [#allocation3]
        %v428 = vld [vmem:[%s427] sm:$0xff]
        %s429 = scalar_lea.vmem %s367, 16 [#allocation3]
        %v430 = vld [vmem:[%s429] sm:$0xff]
        %s431 = scalar_lea.vmem %s367, 24 [#allocation3]
        %v432 = vld [vmem:[%s431] sm:$0xff]
        %v433 = vld [vmem:[%s3] sm:$0xff]
        %v434 = vld [vmem:[%s3 + $0x8] sm:$0xff]
        %v435 = vld [vmem:[%s3 + $0x10] sm:$0xff]
        %v436 = vld [vmem:[%s3 + $0x18] sm:$0xff]
        %v437 = vld [vmem:[%s4] sm:$0xff]
        %v438 = vld [vmem:[%s4 + $0x8] sm:$0xff]
        %vm439 = vcmask 130048
        %v441 = vsel %vm439, %v426, 0
        %v444 = vsel %vm439, %v428, 0
        %v447 = vsel %vm439, %v430, 0
        %v450 = vsel %vm439, %v432, 0
        %452 = vmatpush.msra.mxu0 0.0
        %453 = vmatpush.msra.mxu0 0.0
        %454 = vmatpush.msra.mxu0 0.0
        %455 = vmatpush.msra.mxu0 0.0
        %456 = vmatpush.msra.mxu0 0.0
        %457 = vmatpush.msra.mxu0 0.0
        %458 = vmatpush.msra.mxu0 0.0
        %459 = vmatpush.msra.mxu0 0.0
        %460 = vmatpush.msra.mxu0 0.0
        %461 = vmatpush.msra.mxu0 0.0
        %462 = vmatpush.msra.mxu0 0.0
        %463 = vmatpush.msra.mxu0 0.0
        %464 = vmatpush.msra.mxu0 0.0
        %465 = vmatpush.msra.mxu0 0.0
        %466 = vmatpush.msra.mxu0 %v438
        %467 = vmatpush.msra.mxu0 %v437
        %468 = vmatmul.f32.gmra.mxu0 %v441
        %v469 = vpop.f32.mrf.mxu0
        %v470 = vadd.f32 0.0, %v469
        %471 = vmatmul.f32.gmra.mxu0 %v444
        %v472 = vpop.f32.mrf.mxu0
        %v473 = vadd.f32 0.0, %v472
        %474 = vmatmul.f32.gmra.mxu0 %v447
        %v475 = vpop.f32.mrf.mxu0
        %v476 = vadd.f32 0.0, %v475
        %477 = vmatmul.f32.gmra.mxu0 %v450
        %v478 = vpop.f32.mrf.mxu0
        %v479 = vadd.f32 0.0, %v478
        %480 = vdwg.mxu0
        %vm481 = vcmask 261120
        %v483 = vsel %vm481, %v419, 0
        %v486 = vsel %vm481, %v421, 0
        %v489 = vsel %vm481, %v423, 0
        %v492 = vsel %vm481, %v425, 0
        %494 = vmatpush.msra.mxu0 0.0
        %495 = vmatpush.msra.mxu0 0.0
        %496 = vmatpush.msra.mxu0 0.0
        %497 = vmatpush.msra.mxu0 0.0
        %498 = vmatpush.msra.mxu0 0.0
        %499 = vmatpush.msra.mxu0 0.0
        %500 = vmatpush.msra.mxu0 0.0
        %501 = vmatpush.msra.mxu0 0.0
        %502 = vmatpush.msra.mxu0 0.0
        %503 = vmatpush.msra.mxu0 0.0
        %504 = vmatpush.msra.mxu0 0.0
        %505 = vmatpush.msra.mxu0 0.0
        %506 = vmatpush.msra.mxu0 %v436
        %507 = vmatpush.msra.mxu0 %v435
        %508 = vmatpush.msra.mxu0 %v434
        %509 = vmatpush.msra.mxu0 %v433
        %510 = vmatmul.f32.gmra.mxu0 %v483
        %v511 = vpop.f32.mrf.mxu0
        %v512 = vadd.f32 %v470, %v511
        %513 = vmatmul.f32.gmra.mxu0 %v486
        %v514 = vpop.f32.mrf.mxu0
        %v515 = vadd.f32 %v473, %v514
        %516 = vmatmul.f32.gmra.mxu0 %v489
        %v517 = vpop.f32.mrf.mxu0
        %v518 = vadd.f32 %v476, %v517
        %519 = vmatmul.f32.gmra.mxu0 %v492
        %v520 = vpop.f32.mrf.mxu0
        %v521 = vadd.f32 %v479, %v520
        %522 = vdwg.mxu0
        %v523 = vld [vmem:[%s410] sm:$0xff]
        %v524 = vld [vmem:[%s5] sm:$0x1]
        %v525 = vld [vmem:[%s5 + $0x1] sm:$0x1]
        %v526 = vadd.f32 %v512, %v523
        %v527 = vperm.slane %v524, 0
        %v528 = vmul.f32 %v526, %v527
        %v529 = vperm.slane %v525, 0
        %v530 = vadd.f32 %v528, %v529
        %v531 = vand.u32 2147483647, %v530
        %v532 = vsub.f32 0.0, %v531
        %v533 = vmul.f32 %v532, 1.442695
        %v534 = vpow.pop %v533
        %v535 = vadd.f32 %v534, 1.0
        %v536 = vrcp.pop %v535
        %v537 = vmul.f32 %v535, %v536
        %v538 = vsub.f32 2.0, %v537
        %v539 = vmul.f32 %v536, %v538
        %vm540 = vcmp.ge.f32.partialorder %v530, 0.0
        %v541 = vmul.f32 %v534, %v539
        %v542 = vsel %vm540, %v539, %v541
        %v543 = vmin.f32 %v530, 20.0
        %vm544 = vcmp.gt.f32.partialorder %v530, 20.0
        %v545 = vmul.f32 %v543, 1.442695
        %v546 = vpow.pop %v545
        %v547 = vadd.f32 %v546, 1.0
        %v548 = vlog2.pop %v547
        %v549 = vmul.f32 %v548, 0.6931472
        %v550 = vsel %vm544, %v530, %v549
        %552 = vrot.lane.b32.xlu0 %v550, 96
        %v553 = vpop.permute.xlu0 %552
        %v555 = vmul.f32 %v542, %v553
        %v556 = vadd.f32 %v555, 0.0
        %v557 = vadd.f32 %v515, %v523
        %v558 = vmul.f32 %v557, %v527
        %v559 = vadd.f32 %v558, %v529
        %v560 = vand.u32 2147483647, %v559
        %v561 = vsub.f32 0.0, %v560
        %v562 = vmul.f32 %v561, 1.442695
        %v563 = vpow.pop %v562
        %v564 = vadd.f32 %v563, 1.0
        %v565 = vrcp.pop %v564
        %v566 = vmul.f32 %v564, %v565
        %v567 = vsub.f32 2.0, %v566
        %v568 = vmul.f32 %v565, %v567
        %vm569 = vcmp.ge.f32.partialorder %v559, 0.0
        %v570 = vmul.f32 %v563, %v568
        %v571 = vsel %vm569, %v568, %v570
        %v572 = vmin.f32 %v559, 20.0
        %vm573 = vcmp.gt.f32.partialorder %v559, 20.0
        %v574 = vmul.f32 %v572, 1.442695
        %v575 = vpow.pop %v574
        %v576 = vadd.f32 %v575, 1.0
        %v577 = vlog2.pop %v576
        %v578 = vmul.f32 %v577, 0.6931472
        %v579 = vsel %vm573, %v559, %v578
        %581 = vrot.lane.b32.xlu0 %v579, 96
        %v582 = vpop.permute.xlu0 %581
        %v584 = vmul.f32 %v571, %v582
        %v585 = vadd.f32 %v556, %v584
        %v586 = vadd.f32 %v518, %v523
        %v587 = vmul.f32 %v586, %v527
        %v588 = vadd.f32 %v587, %v529
        %v589 = vand.u32 2147483647, %v588
        %v590 = vsub.f32 0.0, %v589
        %v591 = vmul.f32 %v590, 1.442695
        %v592 = vpow.pop %v591
        %v593 = vadd.f32 %v592, 1.0
        %v594 = vrcp.pop %v593
        %v595 = vmul.f32 %v593, %v594
        %v596 = vsub.f32 2.0, %v595
        %v597 = vmul.f32 %v594, %v596
        %vm598 = vcmp.ge.f32.partialorder %v588, 0.0
        %v599 = vmul.f32 %v592, %v597
        %v600 = vsel %vm598, %v597, %v599
        %v601 = vmin.f32 %v588, 20.0
        %vm602 = vcmp.gt.f32.partialorder %v588, 20.0
        %v603 = vmul.f32 %v601, 1.442695
        %v604 = vpow.pop %v603
        %v605 = vadd.f32 %v604, 1.0
        %v606 = vlog2.pop %v605
        %v607 = vmul.f32 %v606, 0.6931472
        %v608 = vsel %vm602, %v588, %v607
        %610 = vrot.lane.b32.xlu0 %v608, 96
        %v611 = vpop.permute.xlu0 %610
        %v613 = vmul.f32 %v600, %v611
        %v614 = vadd.f32 %v585, %v613
        %v615 = vadd.f32 %v521, %v523
        %v616 = vmul.f32 %v615, %v527
        %v617 = vadd.f32 %v616, %v529
        %v618 = vand.u32 2147483647, %v617
        %v619 = vsub.f32 0.0, %v618
        %v620 = vmul.f32 %v619, 1.442695
        %v621 = vpow.pop %v620
        %v622 = vadd.f32 %v621, 1.0
        %v623 = vrcp.pop %v622
        %v624 = vmul.f32 %v622, %v623
        %v625 = vsub.f32 2.0, %v624
        %v626 = vmul.f32 %v623, %v625
        %vm627 = vcmp.ge.f32.partialorder %v617, 0.0
        %v628 = vmul.f32 %v621, %v626
        %v629 = vsel %vm627, %v626, %v628
        %v630 = vmin.f32 %v617, 20.0
        %vm631 = vcmp.gt.f32.partialorder %v617, 20.0
        %v632 = vmul.f32 %v630, 1.442695
        %v633 = vpow.pop %v632
        %v634 = vadd.f32 %v633, 1.0
        %v635 = vlog2.pop %v634
        %v636 = vmul.f32 %v635, 0.6931472
        %v637 = vsel %vm631, %v617, %v636
        %639 = vrot.lane.b32.xlu0 %v637, 96
        %v640 = vpop.permute.xlu0 %639
        %v642 = vmul.f32 %v629, %v640
        %v643 = vadd.f32 %v614, %v642
        %644 = vst.msk [vmem:[%s414] sm:$0xff] %vm481, %v643
        %v645 = vlaneseq
        %v646 = vshrl.u32 %v645, 7
        %s647 = smul.u32 %s19, 8
        %v648 = vstv %s647
        %v649 = vadd.s32 %v648, %v646
        %vm650 = vcmp.lt.s32.totalorder %v649, 20
        %v651 = vsel %vm650, 1, 0
        %vm652 = vcmp.eq.s32.totalorder %v651, 1
        %v653 = vsel %vm652, %v643, 0.0
        %v654 = vsel %vm481, %v653, 0.0
        %v655 = vrot.slane %v654, 4
        %v656 = vadd.f32 %v654, %v655
        %v657 = vrot.slane %v656, 2
        %v658 = vadd.f32 %v656, %v657
        %v659 = vrot.slane %v658, 1
        %v660 = vadd.f32 %v658, %v659
        %v661 = vmul.f32 %v653, %v653
        %v662 = vsel %vm481, %v661, 0.0
        %v663 = vrot.slane %v662, 4
        %v664 = vadd.f32 %v662, %v663
        %v665 = vrot.slane %v664, 2
        %v666 = vadd.f32 %v664, %v665
        %v667 = vrot.slane %v666, 1
        %v668 = vadd.f32 %v666, %v667
        %vm669 = vcmask 1040384
        %v670 = vsel %vm669, %v660, %v668
        %vm671 = vcmask 254976
        %672 = vst.msk [vmem:[%s418] sm:$0x3] %vm671, %v670
        %p673 = scmp.lt.s32.totalorder %s19, 2
        %s674 = scalar_select %p673, %s19, 2
        %s675 = smul.addr %s674, 8
        %s676 = scalar_lea.vmem %s6, %s675
        %p677 = scmp.lt.s32.totalorder %s19, 2
        %s678 = scalar_select %p677, %s19, 2
        %s679 = smul.addr %s678, 2
        %s680 = scalar_lea.vmem %s7, %s679
        // Predicated region
        $region121: #{conv_layer_forward.4} parent=111 // pred_check
          %p681 = pneg %p178
        $region122: #{conv_layer_forward.4} parent=111 // pred_check_branch
          %683 = sbr.rel (%p681) target = $region124
        $region123: #{conv_layer_forward.4} parent=111 // pred_region
          _
        $region124: #{conv_layer_forward.4} parent=111 // pred_fallthru
          _
        // Predicated region
        $region125: #{conv_layer_forward.4} parent=111 // pred_check
          %p684 = pneg %p204
        $region126: #{conv_layer_forward.4} parent=111 // pred_check_branch
          %686 = sbr.rel (%p684) target = $region128
        $region127: #{conv_layer_forward.4} parent=111 // pred_region
          _
        $region128: #{conv_layer_forward.4} parent=111 // pred_fallthru
          _
      $region112: #{conv_layer_forward.4} parent=5 // pred_fallthru
        _
      %p687 = scmp.le.s32.totalorder 2, %s14
      // Predicated region
      $region129: #{conv_layer_forward.4} parent=5 // pred_check
        %p688 = pneg %p687
      $region130: #{conv_layer_forward.4} parent=5 // pred_check_branch
        %690 = sbr.rel (%p688) target = $region132
      $region131: #{conv_layer_forward.4} parent=5 // pred_region
        %s691 = ssub.s32 %s14, 2
        // Predicated region
        $region133: #{conv_layer_forward.4} parent=131 // pred_check
          %p692 = pneg %p184
        $region134: #{conv_layer_forward.4} parent=131 // pred_check_branch
          %694 = sbr.rel (%p692) target = $region136
        $region135: #{conv_layer_forward.4} parent=131 // pred_region
          %p695 = scmp.lt.s32.totalorder %s20, 2
          %s696 = scalar_select %p695, %s20, 2
          %s697 = smul.addr %s696, 8
          %s698 = scalar_lea.vmem %s6, %s697
        $region136: #{conv_layer_forward.4} parent=131 // pred_fallthru
          _
        // Predicated region
        $region137: #{conv_layer_forward.4} parent=131 // pred_check
          %p699 = pneg %p210
        $region138: #{conv_layer_forward.4} parent=131 // pred_check_branch
          %701 = sbr.rel (%p699) target = $region140
        $region139: #{conv_layer_forward.4} parent=131 // pred_region
          %p702 = scmp.lt.s32.totalorder %s20, 2
          %s703 = scalar_select %p702, %s20, 2
          %s704 = smul.addr %s703, 2
          %s705 = scalar_lea.vmem %s7, %s704
        $region140: #{conv_layer_forward.4} parent=131 // pred_fallthru
          _
      $region132: #{conv_layer_forward.4} parent=5 // pred_fallthru
        _
    $region6: #{conv_layer_forward.4} parent=1 // loop_footer
      %s18 = sadd.s32 1, %s14
    $region7: #{conv_layer_forward.4} parent=1 // loop_footer_branch
      %13 = sbr.rel target = $region3
    $region8: #{conv_layer_forward.4} parent=1 // loop_exit
      _

</llo_original>
